<compile_context>
chip_gen: v6e
topology: v6e:2x2x1
jax: 0.10.0
libtpu: 0.0.40
codegen_flags: <defaults>
</compile_context>

<pallas_src>
import numpy as np
import jax
import jax.numpy as jnp
from jax.experimental import pallas as pl
from jax.experimental.pallas import tpu as pltpu

# ---- small, TPU-friendly sizes (consistent with the module's forward) ----
B = 2              # batch
E = 128            # encoder_dim (stand-in for resnet34's 512)
A = 128            # attention_dim
D = 128            # decoder_dim
EMB = 128          # embedding_dimension (stand-in for 200)
V = 1004           # vocab_size (matches the hardcoded 1004 in `predictions`)
V_PAD = 1024       # lane-aligned vocab
HW = 28            # spatial size of backbone feature map (pooled to 14x14)
P = 14 * 14        # num_pixels = 196
P_PAD = 256        # lane/sublane-aligned pixel count
G = 4 * D          # LSTM gate width
TV = 512           # vocab tile width for the fc-head kernel

HI = jax.lax.Precision.HIGHEST  # accurate f32 matmuls for wrapper precompute + reference


def decoder_kernel(att1_ref, enc_ref, w_al_ref, w_h_ref, b_fb_ref,
                   w_ih_enc_ref, b_lstm_ref, wvproj_ref, mask_ref,
                   h0_ref, c0_ref,
                   h_all_ref, alpha_ref):
    T_pad = h_all_ref.shape[0]                                      # static
    # loop-invariants hoisted out of the fori_loop body (computed once at runtime)
    w_al_b = w_al_ref[...].reshape(1, 1, A)                         # (1,1,A)
    pix_valid = jax.lax.broadcasted_iota(jnp.int32, (B, P_PAD), 1) < P
    neg_big = jnp.float32(-1e30)

    def step(t, carry):
        h, c = carry                                                # f32 (B,D)
        m = mask_ref[t]                                             # (B,1) active-row mask

        # --- fused h projection: [dec_att | f_beta | lstm_hh] in ONE bf16 MXU dot ---
        hproj = jnp.dot(h.astype(jnp.bfloat16), w_h_ref[...],
                        preferred_element_type=jnp.float32)         # (B, A+E+4D)
        att2 = hproj[:, :A]
        fb_pre = hproj[:, A:A + E]
        hh_gates = hproj[:, A + E:]

        # --- attention scores (att1 has enc+dec biases folded; b_alpha cancels in softmax) ---
        att = jnp.maximum(att1_ref[...] + att2[:, None, :], 0.0)    # (B,P_PAD,A)
        scores = jnp.sum(att * w_al_b, axis=-1)                     # (B,P_PAD)
        scores = jnp.where(pix_valid, scores, neg_big)              # mask pixel padding
        scores = scores - jnp.max(scores, axis=1, keepdims=True)    # stable softmax
        ex = jnp.exp(scores)
        alpha = ex * pl.reciprocal(jnp.sum(ex, axis=1, keepdims=True), approx=True)

        # --- attention-weighted encoding on the MXU (bf16 operands, f32 accumulate) ---
        a = jnp.einsum('bqp,bpe->bqe',
                       alpha[:, None, :].astype(jnp.bfloat16), enc_ref[...],
                       preferred_element_type=jnp.float32).reshape(B, E)

        gate = jax.nn.sigmoid(fb_pre + b_fb_ref[...])               # (B,E)
        awe = gate * a

        # --- LSTM gates: embedding projection precomputed (wvproj), hh fused above ---
        gates = (hh_gates
                 + wvproj_ref[t]
                 + jnp.dot(awe.astype(jnp.bfloat16), w_ih_enc_ref[...],
                           preferred_element_type=jnp.float32)
                 + b_lstm_ref[...])                                 # (B,4D): i, f, g, o
        i_g = jax.nn.sigmoid(gates[:, 0 * D:1 * D])
        f_g = jax.nn.sigmoid(gates[:, 1 * D:2 * D])
        g_g = jnp.tanh(gates[:, 2 * D:3 * D])
        o_g = jax.nn.sigmoid(gates[:, 3 * D:4 * D])
        c_new = f_g * c + i_g * g_g
        h_new = o_g * jnp.tanh(c_new)

        # fc head hoisted out of the recurrence: just stash h_new per step
        h_all_ref[t] = h_new
        alpha_ref[t] = m * alpha

        # inactive rows keep their previous state (prefix mask over sorted lengths)
        h = m * h_new + (1.0 - m) * h
        c = m * c_new + (1.0 - m) * c
        return (h, c)

    jax.lax.fori_loop(0, T_pad, step, (h0_ref[...], c0_ref[...]))


def fc_head_kernel(h_ref, mask_ref, w_fc_ref, b_fc_ref, out_ref):
    # ONE batched matmul over all (t, b) rows; masked dense store (lane-dense V tiles).
    preds = (jnp.dot(h_ref[...].astype(jnp.bfloat16), w_fc_ref[...],
                     preferred_element_type=jnp.float32) + b_fc_ref[...])
    out_ref[...] = mask_ref[...] * preds


def make_params(key):
    ks = jax.random.split(key, 20)
    u = lambda k, shape, s=0.05: jax.random.uniform(k, shape, jnp.float32, -s, s)
    return dict(
        embedding=jax.random.uniform(ks[0], (V, EMB), jnp.float32, -0.1, 0.1),
        w_init_h=u(ks[1], (E, D)),       b_init_h=u(ks[2], (1, D)),
        w_init_c=u(ks[3], (E, D)),       b_init_c=u(ks[4], (1, D)),
        w_enc_att=u(ks[5], (E, A)),      b_enc_att=u(ks[6], (1, A)),
        w_dec_att=u(ks[7], (D, A)),      b_dec_att=u(ks[8], (1, A)),
        w_alpha=u(ks[9], (1, A)),        b_alpha=u(ks[10], (1, 1)),
        w_f_beta=u(ks[11], (D, E)),      b_f_beta=u(ks[12], (1, E)),
        w_ih_emb=u(ks[13], (EMB, 4 * D)),
        w_ih_enc=u(ks[14], (E, 4 * D)),
        b_ih=u(ks[15], (1, 4 * D)),
        w_hh=u(ks[16], (D, 4 * D)),      b_hh=u(ks[17], (1, 4 * D)),
        w_fc=jax.random.uniform(ks[18], (D, V), jnp.float32, -0.1, 0.1),
        b_fc=jnp.zeros((1, V), jnp.float32),
    )


def _full_spec(arr):
    n = arr.ndim
    return pl.BlockSpec(arr.shape, lambda i, n=n: (0,) * n)


def encoder_decoder_attention_forward(params, feat_map, encoded_captions, caption_lengths):
    # TODO(synk): the torchvision ResNet-34 backbone is not reproduced here;
    # `feat_map` stands in for `self.resnet(image_batch)` output (NCHW).
    _, C, Hh, Ww = feat_map.shape
    # AdaptiveAvgPool2d((14,14)) on an even multiple == exact window mean
    pooled = feat_map.reshape(B, C, 14, Hh // 14, 14, Ww // 14).mean(axis=(3, 5))
    enc_out = jnp.transpose(pooled, (0, 2, 3, 1)).reshape(B, P, C)          # (B,P,E)

    cl = caption_lengths[:, 0]                        # squeeze(1)
    sort_ind = jnp.argsort(-cl)                       # descending sort indices
    decode_lengths = cl[sort_ind] - 1                 # sorted caption lengths - 1
    # TODO(synk): T is data-dependent -> host sync; wrapper is not jittable as-is.
    decode_lengths_host = np.asarray(decode_lengths).tolist()
    T = int(max(decode_lengths_host))
    T_pad = ((T + 7) // 8) * 8                        # bucketed: fewer recompiles, dense stores

    # ---------- hoisted, time-invariant precompute (plain XLA, f32 highest) ----------
    enc_pad = jnp.pad(enc_out, ((0, 0), (0, P_PAD - P), (0, 0)))            # (B,P_PAD,E)
    att1 = (jnp.dot(enc_pad.reshape(B * P_PAD, E), params['w_enc_att'], precision=HI)
            + params['b_enc_att']).reshape(B, P_PAD, A)
    att1 = att1 + params['b_dec_att'].reshape(1, 1, A)   # fold dec-att bias; b_alpha dropped

    mean_enc = enc_out.mean(axis=1)                       # mean over REAL pixels
    h0 = jnp.dot(mean_enc, params['w_init_h'], precision=HI) + params['b_init_h']
    c0 = jnp.dot(mean_enc, params['w_init_c'], precision=HI) + params['b_init_c']

    # Note: the reference module does NOT reorder encoded_captions/encoder_out by
    # sort_ind; the sorted decode lengths act as a per-row prefix mask.
    wvs = params['embedding'][encoded_captions]                             # (B,L,EMB)
    wvs_t = jnp.transpose(wvs[:, :T, :], (1, 0, 2))                         # (T,B,EMB)
    wvs_t = jnp.pad(wvs_t, ((0, T_pad - T), (0, 0), (0, 0)))                # (T_pad,B,EMB)
    # embedding projection hoisted out of the recurrence (one big MXU matmul)
    wvproj = jnp.dot(wvs_t.reshape(T_pad * B, EMB), params['w_ih_emb'],
                     precision=HI).reshape(T_pad, B, G)

    dl = decode_lengths.astype(jnp.int32)                                   # (B,) sorted desc
    mask = (jnp.arange(T_pad, dtype=jnp.int32)[:, None] < dl[None, :]).astype(jnp.float32)
    mask3 = mask[:, :, None]                                                # (T_pad,B,1)

    # fused h-projection weights: [w_dec_att | w_f_beta | w_hh] -> (D, A+E+4D), bf16 MXU operand
    w_h_fused = jnp.concatenate(
        [params['w_dec_att'], params['w_f_beta'], params['w_hh']], axis=1
    ).astype(jnp.bfloat16)
    b_lstm = params['b_ih'] + params['b_hh']
    enc_bf16 = enc_pad.astype(jnp.bfloat16)
    w_ih_enc_bf16 = params['w_ih_enc'].astype(jnp.bfloat16)
    w_fc_pad = jnp.pad(params['w_fc'], ((0, 0), (0, V_PAD - V))).astype(jnp.bfloat16)
    b_fc_pad = jnp.pad(params['b_fc'], ((0, 0), (0, V_PAD - V)))

    dec_inputs = [att1, enc_bf16, params['w_alpha'], w_h_fused, params['b_f_beta'],
                  w_ih_enc_bf16, b_lstm, wvproj, mask3, h0, c0]

    # ---------- kernel 1: serial decode recurrence (everything VMEM-resident) ----------
    h_all, alphas_full = pl.pallas_call(
        decoder_kernel,
        out_shape=(jax.ShapeDtypeStruct((T_pad, B, D), jnp.float32),
                   jax.ShapeDtypeStruct((T_pad, B, P_PAD), jnp.float32)),
        grid=(1,),
        in_specs=[_full_spec(x) for x in dec_inputs],
        out_specs=(pl.BlockSpec((T_pad, B, D), lambda i: (0, 0, 0)),
                   pl.BlockSpec((T_pad, B, P_PAD), lambda i: (0, 0, 0))),
        compiler_params=pltpu.CompilerParams(dimension_semantics=("arbitrary",)),
    )(*dec_inputs)

    # ---------- kernel 2: fc head, one (T_pad*B, D)@(D, V_PAD) matmul, ----------
    # ---------- tiled over vocab columns ("parallel" -> both TCs on v7x) ----------
    h_flat = h_all.reshape(T_pad * B, D)
    mask_flat = mask.reshape(T_pad * B, 1)
    preds_flat = pl.pallas_call(
        fc_head_kernel,
        out_shape=jax.ShapeDtypeStruct((T_pad * B, V_PAD), jnp.float32),
        grid=(V_PAD // TV,),
        in_specs=[pl.BlockSpec((T_pad * B, D), lambda j: (0, 0)),
                  pl.BlockSpec((T_pad * B, 1), lambda j: (0, 0)),
                  pl.BlockSpec((D, TV), lambda j: (0, j)),
                  pl.BlockSpec((1, TV), lambda j: (0, j))],
        out_specs=pl.BlockSpec((T_pad * B, TV), lambda j: (0, j)),
        compiler_params=pltpu.CompilerParams(dimension_semantics=("parallel",)),
    )(h_flat, mask_flat, w_fc_pad, b_fc_pad)

    preds_full = preds_flat.reshape(T_pad, B, V_PAD)
    predictions = jnp.transpose(preds_full, (1, 0, 2))[:, :T, :V]   # (B, max(decode_lengths), V)
    alphas = jnp.transpose(alphas_full, (1, 0, 2))[:, :T, :P]       # (B, max(decode_lengths), P)
    return predictions, encoded_captions, decode_lengths_host, alphas, sort_ind


def reference_forward(params, feat_map, encoded_captions, caption_lengths):
    """Pure-JAX (XLA, f32 highest precision) reference mirroring the PyTorch forward."""
    _, C, Hh, Ww = feat_map.shape
    pooled = feat_map.reshape(B, C, 14, Hh // 14, 14, Ww // 14).mean(axis=(3, 5))
    enc_out = jnp.transpose(pooled, (0, 2, 3, 1)).reshape(B, P, C)
    cl = caption_lengths[:, 0]
    sort_ind = jnp.argsort(-cl)
    decode_lengths = np.asarray(cl[sort_ind] - 1).tolist()
    T = int(max(decode_lengths))
    wvs = params['embedding'][encoded_captions]
    mean_enc = enc_out.mean(axis=1)
    h = jnp.dot(mean_enc, params['w_init_h'], precision=HI) + params['b_init_h']
    c = jnp.dot(mean_enc, params['w_init_c'], precision=HI) + params['b_init_c']
    att1 = (jnp.dot(enc_out.reshape(B * P, E), params['w_enc_att'], precision=HI)
            + params['b_enc_att']).reshape(B, P, A)
    preds_all = np.zeros((B, T, V), np.float32)
    alphas_all = np.zeros((B, T, P), np.float32)
    for t in range(T):
        nb = sum(l > t for l in decode_lengths)
        att2 = jnp.dot(h, params['w_dec_att'], precision=HI) + params['b_dec_att']
        att = jnp.maximum(att1 + att2[:, None, :], 0.0)
        scores = jnp.sum(att * params['w_alpha'].reshape(1, 1, A), axis=-1) + params['b_alpha']
        alpha = jax.nn.softmax(scores, axis=1)
        a = jnp.sum(enc_out * alpha[:, :, None], axis=1)
        gate = jax.nn.sigmoid(jnp.dot(h, params['w_f_beta'], precision=HI) + params['b_f_beta'])
        awe = gate * a
        gates = (jnp.dot(wvs[:, t, :], params['w_ih_emb'], precision=HI)
                 + jnp.dot(awe, params['w_ih_enc'], precision=HI)
                 + jnp.dot(h, params['w_hh'], precision=HI)
                 + params['b_ih'] + params['b_hh'])
        i_g = jax.nn.sigmoid(gates[:, :D]); f_g = jax.nn.sigmoid(gates[:, D:2 * D])
        g_g = jnp.tanh(gates[:, 2 * D:3 * D]); o_g = jax.nn.sigmoid(gates[:, 3 * D:])
        c_new = f_g * c + i_g * g_g
        h_new = o_g * jnp.tanh(c_new)
        p_t = jnp.dot(h_new, params['w_fc'], precision=HI) + params['b_fc']
        preds_all[:nb, t, :] = np.asarray(p_t[:nb])
        alphas_all[:nb, t, :] = np.asarray(alpha[:nb])
        mask = (np.arange(B) < nb).astype(np.float32)[:, None]
        h = mask * h_new + (1.0 - mask) * h
        c = mask * c_new + (1.0 - mask) * c
    return preds_all, alphas_all


if __name__ == "__main__":
    key = jax.random.PRNGKey(0)
    pkey, fkey, ckey = jax.random.split(key, 3)

    params = make_params(pkey)
    feat_map = jax.random.normal(fkey, (B, E, HW, HW), jnp.float32)          # NCHW backbone features
    encoded_captions = jax.random.randint(ckey, (B, 6), 0, V, dtype=jnp.int32)
    caption_lengths = jnp.array([[6], [4]], dtype=jnp.int32)                 # (B, 1)

    preds, enc_caps, dec_lens, alphas, sort_ind = encoder_decoder_attention_forward(
        params, feat_map, encoded_captions, caption_lengths)
    jax.block_until_ready((preds, alphas, sort_ind))

    assert preds.shape == (B, max(dec_lens), V)
    assert alphas.shape == (B, max(dec_lens), P)
    # rows past their decode length must stay zero (masked timesteps)
    assert float(jnp.abs(preds[1, dec_lens[1]:, :]).max()) == 0.0

    # numerics check against a pure-JAX f32 reference of the module's forward.
    # The kernel uses bf16 MXU operands with f32 accumulation, so predictions get a
    # slightly wider tolerance; alphas (softmax outputs) stay at 2e-3.
    ref_preds, ref_alphas = reference_forward(params, feat_map, encoded_captions, caption_lengths)
    np.testing.assert_allclose(np.asarray(preds), ref_preds, rtol=1e-2, atol=1e-2)
    np.testing.assert_allclose(np.asarray(alphas), ref_alphas, rtol=2e-3, atol=2e-3)
    print("KERNEL_OK")
</pallas_src>

<mosaic_0001>
module attributes {stable_mosaic.version = 11 : i64} {
  func.func @decoder_kernel(%arg0: i32, %arg1: memref<2x256x128xf32, #tpu.memory_space<vmem>>, %arg2: memref<2x256x128xbf16, #tpu.memory_space<vmem>>, %arg3: memref<1x128xf32, #tpu.memory_space<vmem>>, %arg4: memref<128x768xbf16, #tpu.memory_space<vmem>>, %arg5: memref<1x128xf32, #tpu.memory_space<vmem>>, %arg6: memref<128x512xbf16, #tpu.memory_space<vmem>>, %arg7: memref<1x512xf32, #tpu.memory_space<vmem>>, %arg8: memref<8x2x512xf32, #tpu.memory_space<vmem>>, %arg9: memref<8x2x1xf32, #tpu.memory_space<vmem>>, %arg10: memref<2x128xf32, #tpu.memory_space<vmem>>, %arg11: memref<2x128xf32, #tpu.memory_space<vmem>>, %arg12: memref<8x2x128xf32, #tpu.memory_space<vmem>>, %arg13: memref<8x2x256xf32, #tpu.memory_space<vmem>>) attributes {dimension_semantics = [#tpu.dimension_semantics<arbitrary>], iteration_bounds = array<i64: 1>, scalar_prefetch = 0 : i64, scratch_operands = 0 : i64, tpu.core_type = #tpu.core_type<tc>, window_params = [{pipeline_mode = #tpu.pipeline_mode<synchronous>, transform_indices = @transform_0, window_bounds = array<i64: 2, 256, 128>}, {pipeline_mode = #tpu.pipeline_mode<synchronous>, transform_indices = @transform_1, window_bounds = array<i64: 2, 256, 128>}, {pipeline_mode = #tpu.pipeline_mode<synchronous>, transform_indices = @transform_2, window_bounds = array<i64: 1, 128>}, {pipeline_mode = #tpu.pipeline_mode<synchronous>, transform_indices = @transform_3, window_bounds = array<i64: 128, 768>}, {pipeline_mode = #tpu.pipeline_mode<synchronous>, transform_indices = @transform_4, window_bounds = array<i64: 1, 128>}, {pipeline_mode = #tpu.pipeline_mode<synchronous>, transform_indices = @transform_5, window_bounds = array<i64: 128, 512>}, {pipeline_mode = #tpu.pipeline_mode<synchronous>, transform_indices = @transform_6, window_bounds = array<i64: 1, 512>}, {pipeline_mode = #tpu.pipeline_mode<synchronous>, transform_indices = @transform_7, window_bounds = array<i64: 8, 2, 512>}, {pipeline_mode = #tpu.pipeline_mode<synchronous>, transform_indices = @transform_8, window_bounds = array<i64: 8, 2, 1>}, {pipeline_mode = #tpu.pipeline_mode<synchronous>, transform_indices = @transform_9, window_bounds = array<i64: 2, 128>}, {pipeline_mode = #tpu.pipeline_mode<synchronous>, transform_indices = @transform_10, window_bounds = array<i64: 2, 128>}, {pipeline_mode = #tpu.pipeline_mode<synchronous>, transform_indices = @transform_11, window_bounds = array<i64: 8, 2, 128>}, {pipeline_mode = #tpu.pipeline_mode<synchronous>, transform_indices = @transform_12, window_bounds = array<i64: 8, 2, 256>}]} {
    %c0 = arith.constant 0 : index
    %c0_0 = arith.constant 0 : index
    %0 = vector.load %arg3[%c0, %c0_0] : memref<1x128xf32, #tpu.memory_space<vmem>>, vector<1x128xf32>
    %1 = vector.shape_cast %0 : vector<1x128xf32> to vector<1x1x128xf32>
    %2 = tpu.iota {dimensions = array<i32: 1>} : vector<2x256xi32>
    %c196_i32 = arith.constant 196 : i32
    %3 = vector.broadcast %c196_i32 : i32 to vector<2x256xi32>
    %4 = arith.cmpi slt, %2, %3 : vector<2x256xi32>
    %c0_1 = arith.constant 0 : index
    %c0_2 = arith.constant 0 : index
    %5 = vector.load %arg10[%c0_1, %c0_2] : memref<2x128xf32, #tpu.memory_space<vmem>>, vector<2x128xf32>
    %c0_3 = arith.constant 0 : index
    %c0_4 = arith.constant 0 : index
    %6 = vector.load %arg11[%c0_3, %c0_4] : memref<2x128xf32, #tpu.memory_space<vmem>>, vector<2x128xf32>
    %cst = arith.constant -1.000000e+30 : f32
    %c0_i32 = arith.constant 0 : i32
    %c8_i32 = arith.constant 8 : i32
    %7 = arith.addi %c0_i32, %c8_i32 : i32
    %c1_i32 = arith.constant 1 : i32
    %8:2 = scf.for %arg14 = %c0_i32 to %7 step %c1_i32 iter_args(%arg15 = %5, %arg16 = %6) -> (vector<2x128xf32>, vector<2x128xf32>)  : i32 {
      %9 = arith.index_cast %arg14 : i32 to index
      %c0_6 = arith.constant 0 : index
      %c0_7 = arith.constant 0 : index
      %10 = vector.load %arg9[%9, %c0_6, %c0_7] : memref<8x2x1xf32, #tpu.memory_space<vmem>>, vector<1x2x1xf32>
      %11 = vector.shape_cast %10 : vector<1x2x1xf32> to vector<2x1xf32>
      %12 = arith.truncf %arg15 : vector<2x128xf32> to vector<2x128xbf16>
      %c0_8 = arith.constant 0 : index
      %c0_9 = arith.constant 0 : index
      %13 = vector.load %arg4[%c0_8, %c0_9] : memref<128x768xbf16, #tpu.memory_space<vmem>>, vector<128x768xbf16>
      %cst_10 = arith.constant dense<0.000000e+00> : vector<2x768xf32>
      %14 = tpu.matmul %12, %13, %cst_10 {dimension_numbers = #tpu.dot_dimension_numbers<[1], [0], [0], [1], [0, 0, 1, 1], [], []>} : vector<2x128xbf16>, vector<128x768xbf16>, vector<2x768xf32> -> vector<2x768xf32>
      %15 = vector.extract_strided_slice %14 {offsets = [0, 0], sizes = [2, 128], strides = [1, 1]} : vector<2x768xf32> to vector<2x128xf32>
      %16 = vector.extract_strided_slice %14 {offsets = [0, 128], sizes = [2, 128], strides = [1, 1]} : vector<2x768xf32> to vector<2x128xf32>
      %17 = vector.extract_strided_slice %14 {offsets = [0, 256], sizes = [2, 512], strides = [1, 1]} : vector<2x768xf32> to vector<2x512xf32>
      %c0_11 = arith.constant 0 : index
      %c0_12 = arith.constant 0 : index
      %c0_13 = arith.constant 0 : index
      %18 = vector.load %arg1[%c0_11, %c0_12, %c0_13] : memref<2x256x128xf32, #tpu.memory_space<vmem>>, vector<2x256x128xf32>
      %19 = vector.shape_cast %15 : vector<2x128xf32> to vector<2x1x128xf32>
      %20 = vector.broadcast %19 : vector<2x1x128xf32> to vector<2x256x128xf32>
      %21 = arith.addf %18, %20 : vector<2x256x128xf32>
      %cst_14 = arith.constant 0.000000e+00 : f32
      %22 = vector.broadcast %cst_14 : f32 to vector<2x256x128xf32>
      %23 = arith.maximumf %21, %22 : vector<2x256x128xf32>
      %24 = vector.broadcast %1 : vector<1x1x128xf32> to vector<2x256x128xf32>
      %25 = arith.mulf %23, %24 : vector<2x256x128xf32>
      %cst_15 = arith.constant dense<0.000000e+00> : vector<2x256xf32>
      %26 = vector.multi_reduction <add>, %25, %cst_15 [2] : vector<2x256x128xf32> to vector<2x256xf32>
      %27 = vector.broadcast %cst : f32 to vector<2x256xf32>
      %28 = arith.select %4, %26, %27 : vector<2x256xi1>, vector<2x256xf32>
      %cst_16 = arith.constant dense<0xFF800000> : vector<2xf32>
      %29 = vector.multi_reduction <maximumf>, %28, %cst_16 [1] : vector<2x256xf32> to vector<2xf32>
      %30 = vector.shape_cast %29 : vector<2xf32> to vector<2x1xf32>
      %31 = vector.broadcast %30 : vector<2x1xf32> to vector<2x256xf32>
      %32 = arith.subf %28, %31 : vector<2x256xf32>
      %33 = math.exp %32 : vector<2x256xf32>
      %cst_17 = arith.constant dense<0.000000e+00> : vector<2xf32>
      %34 = vector.multi_reduction <add>, %33, %cst_17 [1] : vector<2x256xf32> to vector<2xf32>
      %35 = vector.shape_cast %34 : vector<2xf32> to vector<2x1xf32>
      %36 = tpu.reciprocal %35 {approx = true} : vector<2x1xf32> -> vector<2x1xf32>
      %37 = vector.broadcast %36 : vector<2x1xf32> to vector<2x256xf32>
      %38 = arith.mulf %33, %37 : vector<2x256xf32>
      %39 = vector.shape_cast %38 : vector<2x256xf32> to vector<2x1x256xf32>
      %40 = arith.truncf %39 : vector<2x1x256xf32> to vector<2x1x256xbf16>
      %c0_18 = arith.constant 0 : index
      %c0_19 = arith.constant 0 : index
      %c0_20 = arith.constant 0 : index
      %41 = vector.load %arg2[%c0_18, %c0_19, %c0_20] : memref<2x256x128xbf16, #tpu.memory_space<vmem>>, vector<2x256x128xbf16>
      "tpu.trace_start"() <{level = 10 : i32, message = "bqp,bpe->bqe"}> : () -> ()
      %cst_21 = arith.constant dense<0.000000e+00> : vector<2x1x128xf32>
      %42 = tpu.matmul %40, %41, %cst_21 {dimension_numbers = #tpu.dot_dimension_numbers<[2], [1], [1], [2], [0, 0, 0, 1, 1, 2], [0], [0]>} : vector<2x1x256xbf16>, vector<2x256x128xbf16>, vector<2x1x128xf32> -> vector<2x1x128xf32>
      "tpu.trace_stop"() : () -> ()
      %43 = vector.shape_cast %42 : vector<2x1x128xf32> to vector<2x128xf32>
      %c0_22 = arith.constant 0 : index
      %c0_23 = arith.constant 0 : index
      %44 = vector.load %arg5[%c0_22, %c0_23] : memref<1x128xf32, #tpu.memory_space<vmem>>, vector<1x128xf32>
      %45 = vector.broadcast %44 : vector<1x128xf32> to vector<2x128xf32>
      %46 = arith.addf %16, %45 : vector<2x128xf32>
      %47 = arith.negf %46 : vector<2x128xf32>
      %48 = math.exp %47 : vector<2x128xf32>
      %cst_24 = arith.constant 1.000000e+00 : f32
      %49 = vector.broadcast %cst_24 : f32 to vector<2x128xf32>
      %50 = arith.addf %49, %48 : vector<2x128xf32>
      %51 = arith.divf %49, %50 : vector<2x128xf32>
      %52 = arith.mulf %51, %43 : vector<2x128xf32>
      %53 = arith.index_cast %arg14 : i32 to index
      %c0_25 = arith.constant 0 : index
      %c0_26 = arith.constant 0 : index
      %54 = vector.load %arg8[%53, %c0_25, %c0_26] : memref<8x2x512xf32, #tpu.memory_space<vmem>>, vector<1x2x512xf32>
      %55 = vector.shape_cast %54 : vector<1x2x512xf32> to vector<2x512xf32>
      %56 = arith.addf %17, %55 : vector<2x512xf32>
      %57 = arith.truncf %52 : vector<2x128xf32> to vector<2x128xbf16>
      %c0_27 = arith.constant 0 : index
      %c0_28 = arith.constant 0 : index
      %58 = vector.load %arg6[%c0_27, %c0_28] : memref<128x512xbf16, #tpu.memory_space<vmem>>, vector<128x512xbf16>
      %cst_29 = arith.constant dense<0.000000e+00> : vector<2x512xf32>
      %59 = tpu.matmul %57, %58, %cst_29 {dimension_numbers = #tpu.dot_dimension_numbers<[1], [0], [0], [1], [0, 0, 1, 1], [], []>} : vector<2x128xbf16>, vector<128x512xbf16>, vector<2x512xf32> -> vector<2x512xf32>
      %60 = arith.addf %56, %59 : vector<2x512xf32>
      %c0_30 = arith.constant 0 : index
      %c0_31 = arith.constant 0 : index
      %61 = vector.load %arg7[%c0_30, %c0_31] : memref<1x512xf32, #tpu.memory_space<vmem>>, vector<1x512xf32>
      %62 = vector.broadcast %61 : vector<1x512xf32> to vector<2x512xf32>
      %63 = arith.addf %60, %62 : vector<2x512xf32>
      %64 = vector.extract_strided_slice %63 {offsets = [0, 0], sizes = [2, 128], strides = [1, 1]} : vector<2x512xf32> to vector<2x128xf32>
      %65 = arith.negf %64 : vector<2x128xf32>
      %66 = math.exp %65 : vector<2x128xf32>
      %cst_32 = arith.constant 1.000000e+00 : f32
      %67 = vector.broadcast %cst_32 : f32 to vector<2x128xf32>
      %68 = arith.addf %67, %66 : vector<2x128xf32>
      %69 = arith.divf %67, %68 : vector<2x128xf32>
      %70 = vector.extract_strided_slice %63 {offsets = [0, 128], sizes = [2, 128], strides = [1, 1]} : vector<2x512xf32> to vector<2x128xf32>
      %71 = arith.negf %70 : vector<2x128xf32>
      %72 = math.exp %71 : vector<2x128xf32>
      %cst_33 = arith.constant 1.000000e+00 : f32
      %73 = vector.broadcast %cst_33 : f32 to vector<2x128xf32>
      %74 = arith.addf %73, %72 : vector<2x128xf32>
      %75 = arith.divf %73, %74 : vector<2x128xf32>
      %76 = vector.extract_strided_slice %63 {offsets = [0, 256], sizes = [2, 128], strides = [1, 1]} : vector<2x512xf32> to vector<2x128xf32>
      %77 = math.tanh %76 : vector<2x128xf32>
      %78 = vector.extract_strided_slice %63 {offsets = [0, 384], sizes = [2, 128], strides = [1, 1]} : vector<2x512xf32> to vector<2x128xf32>
      %79 = arith.negf %78 : vector<2x128xf32>
      %80 = math.exp %79 : vector<2x128xf32>
      %cst_34 = arith.constant 1.000000e+00 : f32
      %81 = vector.broadcast %cst_34 : f32 to vector<2x128xf32>
      %82 = arith.addf %81, %80 : vector<2x128xf32>
      %83 = arith.divf %81, %82 : vector<2x128xf32>
      %84 = arith.mulf %75, %arg16 : vector<2x128xf32>
      %85 = arith.mulf %69, %77 : vector<2x128xf32>
      %86 = arith.addf %84, %85 : vector<2x128xf32>
      %87 = math.tanh %86 : vector<2x128xf32>
      %88 = arith.mulf %83, %87 : vector<2x128xf32>
      %89 = arith.index_cast %arg14 : i32 to index
      %c0_35 = arith.constant 0 : index
      %c0_36 = arith.constant 0 : index
      %90 = vector.load %arg12[%89, %c0_35, %c0_36] : memref<8x2x128xf32, #tpu.memory_space<vmem>>, vector<1x2x128xf32>
      %91 = vector.shape_cast %90 : vector<1x2x128xf32> to vector<2x128xf32>
      %92 = vector.shape_cast %88 : vector<2x128xf32> to vector<1x2x128xf32>
      tpu.vector_store %arg12[%89, %c0_35, %c0_36], %92 {strides = array<i32>} : memref<8x2x128xf32, #tpu.memory_space<vmem>>, vector<1x2x128xf32>,
      %93 = vector.broadcast %11 : vector<2x1xf32> to vector<2x256xf32>
      %94 = arith.mulf %93, %38 : vector<2x256xf32>
      %95 = arith.index_cast %arg14 : i32 to index
      %c0_37 = arith.constant 0 : index
      %c0_38 = arith.constant 0 : index
      %96 = vector.load %arg13[%95, %c0_37, %c0_38] : memref<8x2x256xf32, #tpu.memory_space<vmem>>, vector<1x2x256xf32>
      %97 = vector.shape_cast %96 : vector<1x2x256xf32> to vector<2x256xf32>
      %98 = vector.shape_cast %94 : vector<2x256xf32> to vector<1x2x256xf32>
      tpu.vector_store %arg13[%95, %c0_37, %c0_38], %98 {strides = array<i32>} : memref<8x2x256xf32, #tpu.memory_space<vmem>>, vector<1x2x256xf32>,
      %99 = vector.broadcast %11 : vector<2x1xf32> to vector<2x128xf32>
      %100 = arith.mulf %99, %88 : vector<2x128xf32>
      %cst_39 = arith.constant 1.000000e+00 : f32
      %101 = vector.broadcast %cst_39 : f32 to vector<2x1xf32>
      %102 = arith.subf %101, %11 : vector<2x1xf32>
      %103 = vector.broadcast %102 : vector<2x1xf32> to vector<2x128xf32>
      %104 = arith.mulf %103, %arg15 : vector<2x128xf32>
      %105 = arith.addf %100, %104 : vector<2x128xf32>
      %106 = vector.broadcast %11 : vector<2x1xf32> to vector<2x128xf32>
      %107 = arith.mulf %106, %86 : vector<2x128xf32>
      %cst_40 = arith.constant 1.000000e+00 : f32
      %108 = vector.broadcast %cst_40 : f32 to vector<2x1xf32>
      %109 = arith.subf %108, %11 : vector<2x1xf32>
      %110 = vector.broadcast %109 : vector<2x1xf32> to vector<2x128xf32>
      %111 = arith.mulf %110, %arg16 : vector<2x128xf32>
      %112 = arith.addf %107, %111 : vector<2x128xf32>
      scf.yield %105, %112 : vector<2x128xf32>, vector<2x128xf32>
    }
    %c8_i32_5 = arith.constant 8 : i32
    return
  }
  func.func @transform_0(%arg0: i32) -> (i32, i32, i32) {
    %c0_i32 = arith.constant 0 : i32
    %c0_i32_0 = arith.constant 0 : i32
    %c0_i32_1 = arith.constant 0 : i32
    %c0_i32_2 = arith.constant 0 : i32
    return %c0_i32, %c0_i32_0, %c0_i32_1 : i32, i32, i32
  }
  func.func @transform_1(%arg0: i32) -> (i32, i32, i32) {
    %c0_i32 = arith.constant 0 : i32
    %c0_i32_0 = arith.constant 0 : i32
    %c0_i32_1 = arith.constant 0 : i32
    %c0_i32_2 = arith.constant 0 : i32
    return %c0_i32, %c0_i32_0, %c0_i32_1 : i32, i32, i32
  }
  func.func @transform_2(%arg0: i32) -> (i32, i32) {
    %c0_i32 = arith.constant 0 : i32
    %c0_i32_0 = arith.constant 0 : i32
    %c0_i32_1 = arith.constant 0 : i32
    return %c0_i32, %c0_i32_0 : i32, i32
  }
  func.func @transform_3(%arg0: i32) -> (i32, i32) {
    %c0_i32 = arith.constant 0 : i32
    %c0_i32_0 = arith.constant 0 : i32
    %c0_i32_1 = arith.constant 0 : i32
    return %c0_i32, %c0_i32_0 : i32, i32
  }
  func.func @transform_4(%arg0: i32) -> (i32, i32) {
    %c0_i32 = arith.constant 0 : i32
    %c0_i32_0 = arith.constant 0 : i32
    %c0_i32_1 = arith.constant 0 : i32
    return %c0_i32, %c0_i32_0 : i32, i32
  }
  func.func @transform_5(%arg0: i32) -> (i32, i32) {
    %c0_i32 = arith.constant 0 : i32
    %c0_i32_0 = arith.constant 0 : i32
    %c0_i32_1 = arith.constant 0 : i32
    return %c0_i32, %c0_i32_0 : i32, i32
  }
  func.func @transform_6(%arg0: i32) -> (i32, i32) {
    %c0_i32 = arith.constant 0 : i32
    %c0_i32_0 = arith.constant 0 : i32
    %c0_i32_1 = arith.constant 0 : i32
    return %c0_i32, %c0_i32_0 : i32, i32
  }
  func.func @transform_7(%arg0: i32) -> (i32, i32, i32) {
    %c0_i32 = arith.constant 0 : i32
    %c0_i32_0 = arith.constant 0 : i32
    %c0_i32_1 = arith.constant 0 : i32
    %c0_i32_2 = arith.constant 0 : i32
    return %c0_i32, %c0_i32_0, %c0_i32_1 : i32, i32, i32
  }
  func.func @transform_8(%arg0: i32) -> (i32, i32, i32) {
    %c0_i32 = arith.constant 0 : i32
    %c0_i32_0 = arith.constant 0 : i32
    %c0_i32_1 = arith.constant 0 : i32
    %c0_i32_2 = arith.constant 0 : i32
    return %c0_i32, %c0_i32_0, %c0_i32_1 : i32, i32, i32
  }
  func.func @transform_9(%arg0: i32) -> (i32, i32) {
    %c0_i32 = arith.constant 0 : i32
    %c0_i32_0 = arith.constant 0 : i32
    %c0_i32_1 = arith.constant 0 : i32
    return %c0_i32, %c0_i32_0 : i32, i32
  }
  func.func @transform_10(%arg0: i32) -> (i32, i32) {
    %c0_i32 = arith.constant 0 : i32
    %c0_i32_0 = arith.constant 0 : i32
    %c0_i32_1 = arith.constant 0 : i32
    return %c0_i32, %c0_i32_0 : i32, i32
  }
  func.func @transform_11(%arg0: i32) -> (i32, i32, i32) {
    %c0_i32 = arith.constant 0 : i32
    %c0_i32_0 = arith.constant 0 : i32
    %c0_i32_1 = arith.constant 0 : i32
    %c0_i32_2 = arith.constant 0 : i32
    return %c0_i32, %c0_i32_0, %c0_i32_1 : i32, i32, i32
  }
  func.func @transform_12(%arg0: i32) -> (i32, i32, i32) {
    %c0_i32 = arith.constant 0 : i32
    %c0_i32_0 = arith.constant 0 : i32
    %c0_i32_1 = arith.constant 0 : i32
    %c0_i32_2 = arith.constant 0 : i32
    return %c0_i32, %c0_i32_0, %c0_i32_1 : i32, i32, i32
  }
}

</mosaic_0001>

<llo_original>
// kernel: tpu_custom_call.1
$region0: #{tpu_custom_call.1}
  #allocation0 [shape = 'u32[]', space=smem, size = 0x4, offset = 0x4, fixed_abs, tag = 'smem constant byte address 0x4 - core index']
  #allocation1 [shape = 'u32[144,128]{1,0:T(1,128)}', space=vmem, size = 0x12000, scoped, tag = 'internal scratch']
  %s0 = inlined_call_operand.hbm [shape: f32[2,256,128], index: 0, kind: input, shape index: {}]
  %s1 = inlined_call_operand.hbm [shape: bf16[2,256,128], index: 1, kind: input, shape index: {}]
  %s2 = inlined_call_operand.vmem [shape: f32[1,128], index: 2, kind: input, shape index: {}]
  %s3 = inlined_call_operand.hbm [shape: bf16[128,768], index: 3, kind: input, shape index: {}]
  %s4 = inlined_call_operand.vmem [shape: f32[1,128], index: 4, kind: input, shape index: {}]
  %s5 = inlined_call_operand.hbm [shape: bf16[128,512], index: 5, kind: input, shape index: {}]
  %s6 = inlined_call_operand.vmem [shape: f32[1,512], index: 6, kind: input, shape index: {}]
  %s7 = inlined_call_operand.hbm [shape: f32[8,2,512], index: 7, kind: input, shape index: {}]
  %s8 = inlined_call_operand.vmem [shape: f32[8,2,1], index: 8, kind: input, shape index: {}]
  %s9 = inlined_call_operand.vmem [shape: f32[2,128], index: 9, kind: input, shape index: {}]
  %s10 = inlined_call_operand.vmem [shape: f32[2,128], index: 10, kind: input, shape index: {}]
  %s11 = inlined_call_operand.hbm [shape: f32[8,2,128], index: 11, kind: output, shape index: {0}]
  %s12 = inlined_call_operand.hbm [shape: f32[8,2,256], index: 12, kind: output, shape index: {1}]
  %13 = xla_tuple %s11, %s12
  %s14 = sld [smem:[#allocation0]]
  $region89: #{tpu_custom_call.1} parent=0
    _
  %s16 = ssub.s32 1, %s14
  %s17 = scalar_select 0, %s16, %s14
  $region1: #{tpu_custom_call.1} parent=0
    #allocation2 [shape = 'u8[262144]{0}', space=vmem, size = 0x40000, scoped, tag = 'input window, operand 0, single buffered']
    #allocation3 [shape = 's32[1]{0}', space=sflag, size = 0x4, scoped, tag = 'scoped memory for tpu_custom_call.1']
    #allocation4 [shape = 's32[1]{0}', space=sflag, size = 0x4, scoped, tag = 'scoped memory for tpu_custom_call.1']
    #allocation5 [shape = 'u8[131072]{0}', space=vmem, size = 0x20000, scoped, tag = 'input window, operand 1, single buffered']
    #allocation6 [shape = 's32[1]{0}', space=sflag, size = 0x4, scoped, tag = 'scoped memory for tpu_custom_call.1']
    #allocation7 [shape = 'u8[196608]{0}', space=vmem, size = 0x30000, scoped, tag = 'input window, operand 3, single buffered']
    #allocation8 [shape = 'u8[131072]{0}', space=vmem, size = 0x20000, scoped, tag = 'input window, operand 5, single buffered']
    #allocation9 [shape = 's32[1]{0}', space=sflag, size = 0x4, scoped, tag = 'scoped memory for tpu_custom_call.1']
    #allocation10 [shape = 'u8[32768]{0}', space=vmem, size = 0x8000, scoped, tag = 'input window, operand 7, single buffered']
    #allocation11 [shape = 'u8[8192]{0}', space=vmem, size = 0x2000, scoped, tag = 'output window, operand 0, single buffered']
    #allocation12 [shape = 'u8[16384]{0}', space=vmem, size = 0x4000, scoped, tag = 'output window, operand 1, single buffered']
    #allocation13 [shape = 's32[1]{0}', space=sflag, size = 0x4, scoped, tag = 'scoped memory for tpu_custom_call.1']
    %18 = vsyncpa [#allocation3], 0
    %19 = vsyncpa [#allocation6], 0
    %20 = vsyncpa [#allocation9], 0
    %21 = vsyncpa [#allocation4], 0
    %22 = vsyncpa [#allocation13], 0
    // Predicated region
    $region2: #{tpu_custom_call.1} parent=1 // pred_check
      _
    $region3: #{tpu_custom_call.1} parent=1 // pred_check_branch
      %24 = sbr.rel (0) target = $region5
    $region4: #{tpu_custom_call.1} parent=1 // pred_region
      %s26 = ssub.s32 8192, 8192
      %27 = vsyncadd [#allocation3], %s26
      %s28 = sshll.u32 [#allocation2], 4
      %s29 = int_to_ptr.vmem [resolvable:$true] %s28
      %34 = dma.hbm_to_vmem [thread:$0]  %s0, 8192, %s29, [#allocation3], 128, 128, 8
    $region5: #{tpu_custom_call.1} parent=1 // pred_fallthru
      _
    // Predicated region
    $region6: #{tpu_custom_call.1} parent=1 // pred_check
      _
    $region7: #{tpu_custom_call.1} parent=1 // pred_check_branch
      %36 = sbr.rel (0) target = $region9
    $region8: #{tpu_custom_call.1} parent=1 // pred_region
      %s38 = ssub.s32 4096, 4096
      %39 = vsyncadd [#allocation6], %s38
      %s40 = sshll.u32 [#allocation5], 4
      %s41 = int_to_ptr.vmem [resolvable:$true] %s40
      %46 = dma.hbm_to_vmem [thread:$0]  %s1, 4096, %s41, [#allocation6], 64, 64, 4
    $region9: #{tpu_custom_call.1} parent=1 // pred_fallthru
      _
    // Predicated region
    $region10: #{tpu_custom_call.1} parent=1 // pred_check
      _
    $region11: #{tpu_custom_call.1} parent=1 // pred_check_branch
      %48 = sbr.rel (0) target = $region13
    $region12: #{tpu_custom_call.1} parent=1 // pred_region
      _
    $region13: #{tpu_custom_call.1} parent=1 // pred_fallthru
      _
    // Predicated region
    $region14: #{tpu_custom_call.1} parent=1 // pred_check
      _
    $region15: #{tpu_custom_call.1} parent=1 // pred_check_branch
      %50 = sbr.rel (0) target = $region17
    $region16: #{tpu_custom_call.1} parent=1 // pred_region
      %s52 = ssub.s32 6144, 6144
      %53 = vsyncadd [#allocation6], %s52
      %s54 = sshll.u32 [#allocation7], 4
      %s55 = int_to_ptr.vmem [resolvable:$true] %s54
      %60 = dma.hbm_to_vmem [thread:$0]  %s3, 6144, %s55, [#allocation6], 384, 384, 24
    $region17: #{tpu_custom_call.1} parent=1 // pred_fallthru
      _
    // Predicated region
    $region18: #{tpu_custom_call.1} parent=1 // pred_check
      _
    $region19: #{tpu_custom_call.1} parent=1 // pred_check_branch
      %62 = sbr.rel (0) target = $region21
    $region20: #{tpu_custom_call.1} parent=1 // pred_region
      _
    $region21: #{tpu_custom_call.1} parent=1 // pred_fallthru
      _
    // Predicated region
    $region22: #{tpu_custom_call.1} parent=1 // pred_check
      _
    $region23: #{tpu_custom_call.1} parent=1 // pred_check_branch
      %64 = sbr.rel (0) target = $region25
    $region24: #{tpu_custom_call.1} parent=1 // pred_region
      %s66 = ssub.s32 4096, 4096
      %67 = vsyncadd [#allocation9], %s66
      %s68 = sshll.u32 [#allocation8], 4
      %s69 = int_to_ptr.vmem [resolvable:$true] %s68
      %74 = dma.hbm_to_vmem [thread:$0]  %s5, 4096, %s69, [#allocation9], 256, 256, 16
    $region25: #{tpu_custom_call.1} parent=1 // pred_fallthru
      _
    // Predicated region
    $region26: #{tpu_custom_call.1} parent=1 // pred_check
      _
    $region27: #{tpu_custom_call.1} parent=1 // pred_check_branch
      %76 = sbr.rel (0) target = $region29
    $region28: #{tpu_custom_call.1} parent=1 // pred_region
      _
    $region29: #{tpu_custom_call.1} parent=1 // pred_fallthru
      _
    // Predicated region
    $region30: #{tpu_custom_call.1} parent=1 // pred_check
      _
    $region31: #{tpu_custom_call.1} parent=1 // pred_check_branch
      %78 = sbr.rel (0) target = $region33
    $region32: #{tpu_custom_call.1} parent=1 // pred_region
      %s80 = ssub.s32 1024, 1024
      %81 = vsyncadd [#allocation9], %s80
      %s82 = sshll.u32 [#allocation10], 4
      %s83 = int_to_ptr.vmem [resolvable:$true] %s82
      %88 = dma.hbm_to_vmem [thread:$0]  %s7, 1024, %s83, [#allocation9], 128, 128, 8
    $region33: #{tpu_custom_call.1} parent=1 // pred_fallthru
      _
    // Predicated region
    $region34: #{tpu_custom_call.1} parent=1 // pred_check
      _
    $region35: #{tpu_custom_call.1} parent=1 // pred_check_branch
      %90 = sbr.rel (0) target = $region37
    $region36: #{tpu_custom_call.1} parent=1 // pred_region
      _
    $region37: #{tpu_custom_call.1} parent=1 // pred_fallthru
      _
    // Predicated region
    $region38: #{tpu_custom_call.1} parent=1 // pred_check
      _
    $region39: #{tpu_custom_call.1} parent=1 // pred_check_branch
      %92 = sbr.rel (0) target = $region41
    $region40: #{tpu_custom_call.1} parent=1 // pred_region
      _
    $region41: #{tpu_custom_call.1} parent=1 // pred_fallthru
      _
    // Predicated region
    $region42: #{tpu_custom_call.1} parent=1 // pred_check
      _
    $region43: #{tpu_custom_call.1} parent=1 // pred_check_branch
      %94 = sbr.rel (0) target = $region45
    $region44: #{tpu_custom_call.1} parent=1 // pred_region
      _
    $region45: #{tpu_custom_call.1} parent=1 // pred_fallthru
      _
    // Predicated region
    $region46: #{tpu_custom_call.1} parent=1 // pred_check
      _
    $region47: #{tpu_custom_call.1} parent=1 // pred_check_branch
      %96 = sbr.rel (0) target = $region49
    $region48: #{tpu_custom_call.1} parent=1 // pred_region
      %97 = dma.done [#allocation3], 8192
    $region49: #{tpu_custom_call.1} parent=1 // pred_fallthru
      _
    // Predicated region
    $region50: #{tpu_custom_call.1} parent=1 // pred_check
      _
    $region51: #{tpu_custom_call.1} parent=1 // pred_check_branch
      %99 = sbr.rel (0) target = $region53
    $region52: #{tpu_custom_call.1} parent=1 // pred_region
      %100 = dma.done [#allocation6], 4096
    $region53: #{tpu_custom_call.1} parent=1 // pred_fallthru
      _
    // Predicated region
    $region54: #{tpu_custom_call.1} parent=1 // pred_check
      _
    $region55: #{tpu_custom_call.1} parent=1 // pred_check_branch
      %102 = sbr.rel (0) target = $region57
    $region56: #{tpu_custom_call.1} parent=1 // pred_region
      %103 = dma.done [#allocation6], 6144
    $region57: #{tpu_custom_call.1} parent=1 // pred_fallthru
      _
    // Predicated region
    $region58: #{tpu_custom_call.1} parent=1 // pred_check
      _
    $region59: #{tpu_custom_call.1} parent=1 // pred_check_branch
      %105 = sbr.rel (0) target = $region61
    $region60: #{tpu_custom_call.1} parent=1 // pred_region
      %106 = dma.done [#allocation9], 4096
    $region61: #{tpu_custom_call.1} parent=1 // pred_fallthru
      _
    // Predicated region
    $region62: #{tpu_custom_call.1} parent=1 // pred_check
      _
    $region63: #{tpu_custom_call.1} parent=1 // pred_check_branch
      %108 = sbr.rel (0) target = $region65
    $region64: #{tpu_custom_call.1} parent=1 // pred_region
      %109 = dma.done [#allocation9], 1024
    $region65: #{tpu_custom_call.1} parent=1 // pred_fallthru
      _
    %v111 = vld [vmem:[%s2] sm:$0x1]
    %v112 = vlaneseq
    %v113 = vand.u32 %v112, 127
    %v114 = vadd.s32 %v113, 128
    %vm115 = vcmp.lt.s32.totalorder %v113, 196
    %vm116 = vcmp.lt.s32.totalorder %v114, 196
    %v117 = vld [vmem:[%s9] sm:$0x3]
    %v118 = vld [vmem:[%s10] sm:$0x3]
    loop: start=0, step=1, limit=8
    $region66: #{tpu_custom_call.1} parent=1 // loop_pre_header
      _
    $region67: #{tpu_custom_call.1} parent=1 // loop_header
      %s120 = sphi 0, %s124
      %p121 = scmp.ge.s32.totalorder %s120, 8
      %v125 = vphi %v117, %v2197
      %v126 = vphi %v118, %v2200
    $region68: #{tpu_custom_call.1} parent=1 // loop_header_branch
      %123 = sbr.rel (%p121) target = $region72
    $region69: #{tpu_custom_call.1} parent=1 // loop_body
      %s127 = smul.u32 %s120, 2
      %s128 = scalar_lea.vmem %s8, %s127
      %v129 = vld [vmem:[%s128] sm:$0x3]
      %v130 = vpack.c.bf16 %v125, %v125
      %v131 = vld [vmem:[#allocation7] sm:$0xff]
      %v132 = vld [vmem:[#allocation7 + $0x8] sm:$0xff]
      %v133 = vld [vmem:[#allocation7 + $0x10] sm:$0xff]
      %v134 = vld [vmem:[#allocation7 + $0x18] sm:$0xff]
      %v135 = vld [vmem:[#allocation7 + $0x20] sm:$0xff]
      %v136 = vld [vmem:[#allocation7 + $0x28] sm:$0xff]
      %v137 = vld [vmem:[#allocation7 + $0x30] sm:$0xff]
      %v138 = vld [vmem:[#allocation7 + $0x38] sm:$0xff]
      %v139 = vld [vmem:[#allocation7 + $0x40] sm:$0xff]
      %v140 = vld [vmem:[#allocation7 + $0x48] sm:$0xff]
      %v141 = vld [vmem:[#allocation7 + $0x50] sm:$0xff]
      %v142 = vld [vmem:[#allocation7 + $0x58] sm:$0xff]
      %v143 = vld [vmem:[#allocation7 + $0x60] sm:$0xff]
      %v144 = vld [vmem:[#allocation7 + $0x68] sm:$0xff]
      %v145 = vld [vmem:[#allocation7 + $0x70] sm:$0xff]
      %v146 = vld [vmem:[#allocation7 + $0x78] sm:$0xff]
      %v147 = vld [vmem:[#allocation7 + $0x80] sm:$0xff]
      %v148 = vld [vmem:[#allocation7 + $0x88] sm:$0xff]
      %v149 = vld [vmem:[#allocation7 + $0x90] sm:$0xff]
      %v150 = vld [vmem:[#allocation7 + $0x98] sm:$0xff]
      %v151 = vld [vmem:[#allocation7 + $0xa0] sm:$0xff]
      %v152 = vld [vmem:[#allocation7 + $0xa8] sm:$0xff]
      %v153 = vld [vmem:[#allocation7 + $0xb0] sm:$0xff]
      %v154 = vld [vmem:[#allocation7 + $0xb8] sm:$0xff]
      %v155 = vld [vmem:[#allocation7 + $0xc0] sm:$0xff]
      %v156 = vld [vmem:[#allocation7 + $0xc8] sm:$0xff]
      %v157 = vld [vmem:[#allocation7 + $0xd0] sm:$0xff]
      %v158 = vld [vmem:[#allocation7 + $0xd8] sm:$0xff]
      %v159 = vld [vmem:[#allocation7 + $0xe0] sm:$0xff]
      %v160 = vld [vmem:[#allocation7 + $0xe8] sm:$0xff]
      %v161 = vld [vmem:[#allocation7 + $0xf0] sm:$0xff]
      %v162 = vld [vmem:[#allocation7 + $0xf8] sm:$0xff]
      %v163 = vld [vmem:[#allocation7 + $0x100] sm:$0xff]
      %v164 = vld [vmem:[#allocation7 + $0x108] sm:$0xff]
      %v165 = vld [vmem:[#allocation7 + $0x110] sm:$0xff]
      %v166 = vld [vmem:[#allocation7 + $0x118] sm:$0xff]
      %v167 = vld [vmem:[#allocation7 + $0x120] sm:$0xff]
      %v168 = vld [vmem:[#allocation7 + $0x128] sm:$0xff]
      %v169 = vld [vmem:[#allocation7 + $0x130] sm:$0xff]
      %v170 = vld [vmem:[#allocation7 + $0x138] sm:$0xff]
      %v171 = vld [vmem:[#allocation7 + $0x140] sm:$0xff]
      %v172 = vld [vmem:[#allocation7 + $0x148] sm:$0xff]
      %v173 = vld [vmem:[#allocation7 + $0x150] sm:$0xff]
      %v174 = vld [vmem:[#allocation7 + $0x158] sm:$0xff]
      %v175 = vld [vmem:[#allocation7 + $0x160] sm:$0xff]
      %v176 = vld [vmem:[#allocation7 + $0x168] sm:$0xff]
      %v177 = vld [vmem:[#allocation7 + $0x170] sm:$0xff]
      %v178 = vld [vmem:[#allocation7 + $0x178] sm:$0xff]
      %v227 = vunpack.c.l.b16 %v131
      %v228 = vunpack.c.h.b16 %v131
      %v229 = vunpack.c.l.b16 %v132
      %v230 = vunpack.c.h.b16 %v132
      %v231 = vunpack.c.l.b16 %v133
      %v232 = vunpack.c.h.b16 %v133
      %v233 = vunpack.c.l.b16 %v134
      %v234 = vunpack.c.h.b16 %v134
      %v235 = vunpack.c.l.b16 %v135
      %v236 = vunpack.c.h.b16 %v135
      %v237 = vunpack.c.l.b16 %v136
      %v238 = vunpack.c.h.b16 %v136
      %v239 = vunpack.c.l.b16 %v137
      %v240 = vunpack.c.h.b16 %v137
      %v241 = vunpack.c.l.b16 %v138
      %v242 = vunpack.c.h.b16 %v138
      %v243 = vunpack.c.l.b16 %v139
      %v244 = vunpack.c.h.b16 %v139
      %v245 = vunpack.c.l.b16 %v140
      %v246 = vunpack.c.h.b16 %v140
      %v247 = vunpack.c.l.b16 %v141
      %v248 = vunpack.c.h.b16 %v141
      %v249 = vunpack.c.l.b16 %v142
      %v250 = vunpack.c.h.b16 %v142
      %v251 = vunpack.c.l.b16 %v143
      %v252 = vunpack.c.h.b16 %v143
      %v253 = vunpack.c.l.b16 %v144
      %v254 = vunpack.c.h.b16 %v144
      %v255 = vunpack.c.l.b16 %v145
      %v256 = vunpack.c.h.b16 %v145
      %v257 = vunpack.c.l.b16 %v146
      %v258 = vunpack.c.h.b16 %v146
      %v259 = vunpack.c.l.b16 %v147
      %v260 = vunpack.c.h.b16 %v147
      %v261 = vunpack.c.l.b16 %v148
      %v262 = vunpack.c.h.b16 %v148
      %v263 = vunpack.c.l.b16 %v149
      %v264 = vunpack.c.h.b16 %v149
      %v265 = vunpack.c.l.b16 %v150
      %v266 = vunpack.c.h.b16 %v150
      %v267 = vunpack.c.l.b16 %v151
      %v268 = vunpack.c.h.b16 %v151
      %v269 = vunpack.c.l.b16 %v152
      %v270 = vunpack.c.h.b16 %v152
      %v271 = vunpack.c.l.b16 %v153
      %v272 = vunpack.c.h.b16 %v153
      %v273 = vunpack.c.l.b16 %v154
      %v274 = vunpack.c.h.b16 %v154
      %v275 = vunpack.c.l.b16 %v155
      %v276 = vunpack.c.h.b16 %v155
      %v277 = vunpack.c.l.b16 %v156
      %v278 = vunpack.c.h.b16 %v156
      %v279 = vunpack.c.l.b16 %v157
      %v280 = vunpack.c.h.b16 %v157
      %v281 = vunpack.c.l.b16 %v158
      %v282 = vunpack.c.h.b16 %v158
      %v283 = vunpack.c.l.b16 %v159
      %v284 = vunpack.c.h.b16 %v159
      %v285 = vunpack.c.l.b16 %v160
      %v286 = vunpack.c.h.b16 %v160
      %v287 = vunpack.c.l.b16 %v161
      %v288 = vunpack.c.h.b16 %v161
      %v289 = vunpack.c.l.b16 %v162
      %v290 = vunpack.c.h.b16 %v162
      %v291 = vunpack.c.l.b16 %v163
      %v292 = vunpack.c.h.b16 %v163
      %v293 = vunpack.c.l.b16 %v164
      %v294 = vunpack.c.h.b16 %v164
      %v295 = vunpack.c.l.b16 %v165
      %v296 = vunpack.c.h.b16 %v165
      %v297 = vunpack.c.l.b16 %v166
      %v298 = vunpack.c.h.b16 %v166
      %v299 = vunpack.c.l.b16 %v167
      %v300 = vunpack.c.h.b16 %v167
      %v301 = vunpack.c.l.b16 %v168
      %v302 = vunpack.c.h.b16 %v168
      %v303 = vunpack.c.l.b16 %v169
      %v304 = vunpack.c.h.b16 %v169
      %v305 = vunpack.c.l.b16 %v170
      %v306 = vunpack.c.h.b16 %v170
      %v307 = vunpack.c.l.b16 %v171
      %v308 = vunpack.c.h.b16 %v171
      %v309 = vunpack.c.l.b16 %v172
      %v310 = vunpack.c.h.b16 %v172
      %v311 = vunpack.c.l.b16 %v173
      %v312 = vunpack.c.h.b16 %v173
      %v313 = vunpack.c.l.b16 %v174
      %v314 = vunpack.c.h.b16 %v174
      %v315 = vunpack.c.l.b16 %v175
      %v316 = vunpack.c.h.b16 %v175
      %v317 = vunpack.c.l.b16 %v176
      %v318 = vunpack.c.h.b16 %v176
      %v319 = vunpack.c.l.b16 %v177
      %v320 = vunpack.c.h.b16 %v177
      %v321 = vunpack.c.l.b16 %v178
      %v322 = vunpack.c.h.b16 %v178
      %v323 = vpack.c.b16 %v233, %v227
      %v324 = vpack.c.b16 %v234, %v228
      %v325 = vpack.c.b16 %v235, %v229
      %v326 = vpack.c.b16 %v236, %v230
      %v327 = vpack.c.b16 %v237, %v231
      %v328 = vpack.c.b16 %v238, %v232
      %v329 = vpack.c.b16 %v245, %v239
      %v330 = vpack.c.b16 %v246, %v240
      %v331 = vpack.c.b16 %v247, %v241
      %v332 = vpack.c.b16 %v248, %v242
      %v333 = vpack.c.b16 %v249, %v243
      %v334 = vpack.c.b16 %v250, %v244
      %v335 = vpack.c.b16 %v257, %v251
      %v336 = vpack.c.b16 %v258, %v252
      %v337 = vpack.c.b16 %v259, %v253
      %v338 = vpack.c.b16 %v260, %v254
      %v339 = vpack.c.b16 %v261, %v255
      %v340 = vpack.c.b16 %v262, %v256
      %v341 = vpack.c.b16 %v269, %v263
      %v342 = vpack.c.b16 %v270, %v264
      %v343 = vpack.c.b16 %v271, %v265
      %v344 = vpack.c.b16 %v272, %v266
      %v345 = vpack.c.b16 %v273, %v267
      %v346 = vpack.c.b16 %v274, %v268
      %v347 = vpack.c.b16 %v281, %v275
      %v348 = vpack.c.b16 %v282, %v276
      %v349 = vpack.c.b16 %v283, %v277
      %v350 = vpack.c.b16 %v284, %v278
      %v351 = vpack.c.b16 %v285, %v279
      %v352 = vpack.c.b16 %v286, %v280
      %v353 = vpack.c.b16 %v293, %v287
      %v354 = vpack.c.b16 %v294, %v288
      %v355 = vpack.c.b16 %v295, %v289
      %v356 = vpack.c.b16 %v296, %v290
      %v357 = vpack.c.b16 %v297, %v291
      %v358 = vpack.c.b16 %v298, %v292
      %v359 = vpack.c.b16 %v305, %v299
      %v360 = vpack.c.b16 %v306, %v300
      %v361 = vpack.c.b16 %v307, %v301
      %v362 = vpack.c.b16 %v308, %v302
      %v363 = vpack.c.b16 %v309, %v303
      %v364 = vpack.c.b16 %v310, %v304
      %v365 = vpack.c.b16 %v317, %v311
      %v366 = vpack.c.b16 %v318, %v312
      %v367 = vpack.c.b16 %v319, %v313
      %v368 = vpack.c.b16 %v320, %v314
      %v369 = vpack.c.b16 %v321, %v315
      %v370 = vpack.c.b16 %v322, %v316
      %419 = vmatprep.subr.bf16.mxu0 %v366
      %420 = vmatpush1.bf16.msra.mxu0 %v365
      %421 = vmatprep.subr.bf16.mxu0 %v360
      %422 = vmatpush1.bf16.msra.mxu0 %v359
      %423 = vmatprep.subr.bf16.mxu0 %v354
      %424 = vmatpush1.bf16.msra.mxu0 %v353
      %425 = vmatprep.subr.bf16.mxu0 %v348
      %426 = vmatpush1.bf16.msra.mxu0 %v347
      %427 = vmatprep.subr.bf16.mxu0 %v342
      %428 = vmatpush1.bf16.msra.mxu0 %v341
      %429 = vmatprep.subr.bf16.mxu0 %v336
      %430 = vmatpush1.bf16.msra.mxu0 %v335
      %431 = vmatprep.subr.bf16.mxu0 %v330
      %432 = vmatpush1.bf16.msra.mxu0 %v329
      %433 = vmatprep.subr.bf16.mxu0 %v324
      %434 = vmatpush1.bf16.msra.mxu0 %v323
      %435 = vmatprep.subr.bf16.mxu0 0
      %436 = vmatpush2.bf16.msra.mxu0 0
      %437 = vmatprep.subr.bf16.mxu0 0
      %438 = vmatpush2.bf16.msra.mxu0 0
      %439 = vmatprep.subr.bf16.mxu0 0
      %440 = vmatpush2.bf16.msra.mxu0 0
      %441 = vmatprep.subr.bf16.mxu0 0
      %442 = vmatpush2.bf16.msra.mxu0 0
      %443 = vmatprep.subr.bf16.mxu0 0
      %444 = vmatpush2.bf16.msra.mxu0 0
      %445 = vmatprep.subr.bf16.mxu0 0
      %446 = vmatpush2.bf16.msra.mxu0 0
      %447 = vmatprep.subr.bf16.mxu0 0
      %448 = vmatpush2.bf16.msra.mxu0 0
      %449 = vmatprep.subr.bf16.mxu0 0
      %450 = vmatpush2.bf16.msra.mxu0 0
      %451 = vmatprep.mubr.bf16.mxu0 0
      %452 = vmatmul.mubr.bf16.gmra.mxu0 %v130
      %v453 = vpop.f32.mrf.mxu0
      %v454 = vadd.f32 0.0, %v453
      %v455 = vpop.f32.mrf.mxu0
      %v456 = vadd.f32 0.0, %v455
      %v457 = vpop.f32.mrf.mxu0
      %v458 = vpop.f32.mrf.mxu0
      %459 = vdwg.mxu0
      %460 = vmatprep.subr.bf16.mxu0 %v368
      %461 = vmatpush1.bf16.msra.mxu0 %v367
      %462 = vmatprep.subr.bf16.mxu0 %v362
      %463 = vmatpush1.bf16.msra.mxu0 %v361
      %464 = vmatprep.subr.bf16.mxu0 %v356
      %465 = vmatpush1.bf16.msra.mxu0 %v355
      %466 = vmatprep.subr.bf16.mxu0 %v350
      %467 = vmatpush1.bf16.msra.mxu0 %v349
      %468 = vmatprep.subr.bf16.mxu0 %v344
      %469 = vmatpush1.bf16.msra.mxu0 %v343
      %470 = vmatprep.subr.bf16.mxu0 %v338
      %471 = vmatpush1.bf16.msra.mxu0 %v337
      %472 = vmatprep.subr.bf16.mxu0 %v332
      %473 = vmatpush1.bf16.msra.mxu0 %v331
      %474 = vmatprep.subr.bf16.mxu0 %v326
      %475 = vmatpush1.bf16.msra.mxu0 %v325
      %476 = vmatprep.subr.bf16.mxu0 0
      %477 = vmatpush2.bf16.msra.mxu0 0
      %478 = vmatprep.subr.bf16.mxu0 0
      %479 = vmatpush2.bf16.msra.mxu0 0
      %480 = vmatprep.subr.bf16.mxu0 0
      %481 = vmatpush2.bf16.msra.mxu0 0
      %482 = vmatprep.subr.bf16.mxu0 0
      %483 = vmatpush2.bf16.msra.mxu0 0
      %484 = vmatprep.subr.bf16.mxu0 0
      %485 = vmatpush2.bf16.msra.mxu0 0
      %486 = vmatprep.subr.bf16.mxu0 0
      %487 = vmatpush2.bf16.msra.mxu0 0
      %488 = vmatprep.subr.bf16.mxu0 0
      %489 = vmatpush2.bf16.msra.mxu0 0
      %490 = vmatprep.subr.bf16.mxu0 0
      %491 = vmatpush2.bf16.msra.mxu0 0
      %492 = vmatprep.mubr.bf16.mxu0 0
      %493 = vmatmul.mubr.bf16.gmra.mxu0 %v130
      %v494 = vpop.f32.mrf.mxu0
      %v495 = vadd.f32 0.0, %v494
      %v496 = vpop.f32.mrf.mxu0
      %v497 = vadd.f32 0.0, %v496
      %v498 = vpop.f32.mrf.mxu0
      %v499 = vpop.f32.mrf.mxu0
      %500 = vdwg.mxu0
      %501 = vmatprep.subr.bf16.mxu0 %v370
      %502 = vmatpush1.bf16.msra.mxu0 %v369
      %503 = vmatprep.subr.bf16.mxu0 %v364
      %504 = vmatpush1.bf16.msra.mxu0 %v363
      %505 = vmatprep.subr.bf16.mxu0 %v358
      %506 = vmatpush1.bf16.msra.mxu0 %v357
      %507 = vmatprep.subr.bf16.mxu0 %v352
      %508 = vmatpush1.bf16.msra.mxu0 %v351
      %509 = vmatprep.subr.bf16.mxu0 %v346
      %510 = vmatpush1.bf16.msra.mxu0 %v345
      %511 = vmatprep.subr.bf16.mxu0 %v340
      %512 = vmatpush1.bf16.msra.mxu0 %v339
      %513 = vmatprep.subr.bf16.mxu0 %v334
      %514 = vmatpush1.bf16.msra.mxu0 %v333
      %515 = vmatprep.subr.bf16.mxu0 %v328
      %516 = vmatpush1.bf16.msra.mxu0 %v327
      %517 = vmatprep.subr.bf16.mxu0 0
      %518 = vmatpush2.bf16.msra.mxu0 0
      %519 = vmatprep.subr.bf16.mxu0 0
      %520 = vmatpush2.bf16.msra.mxu0 0
      %521 = vmatprep.subr.bf16.mxu0 0
      %522 = vmatpush2.bf16.msra.mxu0 0
      %523 = vmatprep.subr.bf16.mxu0 0
      %524 = vmatpush2.bf16.msra.mxu0 0
      %525 = vmatprep.subr.bf16.mxu0 0
      %526 = vmatpush2.bf16.msra.mxu0 0
      %527 = vmatprep.subr.bf16.mxu0 0
      %528 = vmatpush2.bf16.msra.mxu0 0
      %529 = vmatprep.subr.bf16.mxu0 0
      %530 = vmatpush2.bf16.msra.mxu0 0
      %531 = vmatprep.subr.bf16.mxu0 0
      %532 = vmatpush2.bf16.msra.mxu0 0
      %533 = vmatprep.mubr.bf16.mxu0 0
      %534 = vmatmul.mubr.bf16.gmra.mxu0 %v130
      %v535 = vpop.f32.mrf.mxu0
      %v536 = vadd.f32 0.0, %v535
      %v537 = vpop.f32.mrf.mxu0
      %v538 = vadd.f32 0.0, %v537
      %v539 = vpop.f32.mrf.mxu0
      %v540 = vpop.f32.mrf.mxu0
      %541 = vdwg.mxu0
      %v542 = vld [vmem:[#allocation2] sm:$0xff]
      %v543 = vld [vmem:[#allocation2 + $0x8] sm:$0xff]
      %v544 = vld [vmem:[#allocation2 + $0x10] sm:$0xff]
      %v545 = vld [vmem:[#allocation2 + $0x18] sm:$0xff]
      %v546 = vld [vmem:[#allocation2 + $0x20] sm:$0xff]
      %v547 = vld [vmem:[#allocation2 + $0x28] sm:$0xff]
      %v548 = vld [vmem:[#allocation2 + $0x30] sm:$0xff]
      %v549 = vld [vmem:[#allocation2 + $0x38] sm:$0xff]
      %v550 = vld [vmem:[#allocation2 + $0x40] sm:$0xff]
      %v551 = vld [vmem:[#allocation2 + $0x48] sm:$0xff]
      %v552 = vld [vmem:[#allocation2 + $0x50] sm:$0xff]
      %v553 = vld [vmem:[#allocation2 + $0x58] sm:$0xff]
      %v554 = vld [vmem:[#allocation2 + $0x60] sm:$0xff]
      %v555 = vld [vmem:[#allocation2 + $0x68] sm:$0xff]
      %v556 = vld [vmem:[#allocation2 + $0x70] sm:$0xff]
      %v557 = vld [vmem:[#allocation2 + $0x78] sm:$0xff]
      %v558 = vld [vmem:[#allocation2 + $0x80] sm:$0xff]
      %v559 = vld [vmem:[#allocation2 + $0x88] sm:$0xff]
      %v560 = vld [vmem:[#allocation2 + $0x90] sm:$0xff]
      %v561 = vld [vmem:[#allocation2 + $0x98] sm:$0xff]
      %v562 = vld [vmem:[#allocation2 + $0xa0] sm:$0xff]
      %v563 = vld [vmem:[#allocation2 + $0xa8] sm:$0xff]
      %v564 = vld [vmem:[#allocation2 + $0xb0] sm:$0xff]
      %v565 = vld [vmem:[#allocation2 + $0xb8] sm:$0xff]
      %v566 = vld [vmem:[#allocation2 + $0xc0] sm:$0xff]
      %v567 = vld [vmem:[#allocation2 + $0xc8] sm:$0xff]
      %v568 = vld [vmem:[#allocation2 + $0xd0] sm:$0xff]
      %v569 = vld [vmem:[#allocation2 + $0xd8] sm:$0xff]
      %v570 = vld [vmem:[#allocation2 + $0xe0] sm:$0xff]
      %v571 = vld [vmem:[#allocation2 + $0xe8] sm:$0xff]
      %v572 = vld [vmem:[#allocation2 + $0xf0] sm:$0xff]
      %v573 = vld [vmem:[#allocation2 + $0xf8] sm:$0xff]
      %v574 = vld [vmem:[#allocation2 + $0x100] sm:$0xff]
      %v575 = vld [vmem:[#allocation2 + $0x108] sm:$0xff]
      %v576 = vld [vmem:[#allocation2 + $0x110] sm:$0xff]
      %v577 = vld [vmem:[#allocation2 + $0x118] sm:$0xff]
      %v578 = vld [vmem:[#allocation2 + $0x120] sm:$0xff]
      %v579 = vld [vmem:[#allocation2 + $0x128] sm:$0xff]
      %v580 = vld [vmem:[#allocation2 + $0x130] sm:$0xff]
      %v581 = vld [vmem:[#allocation2 + $0x138] sm:$0xff]
      %v582 = vld [vmem:[#allocation2 + $0x140] sm:$0xff]
      %v583 = vld [vmem:[#allocation2 + $0x148] sm:$0xff]
      %v584 = vld [vmem:[#allocation2 + $0x150] sm:$0xff]
      %v585 = vld [vmem:[#allocation2 + $0x158] sm:$0xff]
      %v586 = vld [vmem:[#allocation2 + $0x160] sm:$0xff]
      %v587 = vld [vmem:[#allocation2 + $0x168] sm:$0xff]
      %v588 = vld [vmem:[#allocation2 + $0x170] sm:$0xff]
      %v589 = vld [vmem:[#allocation2 + $0x178] sm:$0xff]
      %v590 = vld [vmem:[#allocation2 + $0x180] sm:$0xff]
      %v591 = vld [vmem:[#allocation2 + $0x188] sm:$0xff]
      %v592 = vld [vmem:[#allocation2 + $0x190] sm:$0xff]
      %v593 = vld [vmem:[#allocation2 + $0x198] sm:$0xff]
      %v594 = vld [vmem:[#allocation2 + $0x1a0] sm:$0xff]
      %v595 = vld [vmem:[#allocation2 + $0x1a8] sm:$0xff]
      %v596 = vld [vmem:[#allocation2 + $0x1b0] sm:$0xff]
      %v597 = vld [vmem:[#allocation2 + $0x1b8] sm:$0xff]
      %v598 = vld [vmem:[#allocation2 + $0x1c0] sm:$0xff]
      %v599 = vld [vmem:[#allocation2 + $0x1c8] sm:$0xff]
      %v600 = vld [vmem:[#allocation2 + $0x1d0] sm:$0xff]
      %v601 = vld [vmem:[#allocation2 + $0x1d8] sm:$0xff]
      %v602 = vld [vmem:[#allocation2 + $0x1e0] sm:$0xff]
      %v603 = vld [vmem:[#allocation2 + $0x1e8] sm:$0xff]
      %v604 = vld [vmem:[#allocation2 + $0x1f0] sm:$0xff]
      %v605 = vld [vmem:[#allocation2 + $0x1f8] sm:$0xff]
      %v608 = vunpack.c.l.s4 1966171168
      %v609 = vunpack.c.0.s8 %v608
      %v610 = vlaneseq
      %v611 = vshrl.u32 %v610, 7
      %v612 = vsub.s32 %v609, %v611
      %v613 = vrot.slane %v454, %v612
      %v614 = vcombine.high %v613, %v613
      %v616 = vunpack.c.l.s4 1966171168
      %v617 = vunpack.c.0.s8 %v616
      %v618 = vlaneseq
      %v619 = vshrl.u32 %v618, 7
      %v620 = vsub.s32 %v617, %v619
      %v621 = vrot.slane %v613, %v620
      %v623 = vunpack.c.l.s4 1966171168
      %v624 = vunpack.c.0.s8 %v623
      %v625 = vlaneseq
      %v626 = vshrl.u32 %v625, 7
      %v627 = vsub.s32 %v624, %v626
      %v628 = vrot.slane %v614, %v627
      %v629 = vlaneseq
      %v630 = vshrl.u32 %v629, 7
      %v631 = vsub.s32 0, %v630
      %v632 = vrot.slane %v621, %v631
      %v633 = vlaneseq
      %v634 = vshrl.u32 %v633, 7
      %v635 = vsub.s32 0, %v634
      %v636 = vrot.slane %v628, %v635
      %v639 = vadd.f32 %v542, %v632
      %v640 = vadd.f32 %v543, %v632
      %v641 = vadd.f32 %v544, %v632
      %v642 = vadd.f32 %v545, %v632
      %v643 = vadd.f32 %v546, %v632
      %v644 = vadd.f32 %v547, %v632
      %v645 = vadd.f32 %v548, %v632
      %v646 = vadd.f32 %v549, %v632
      %v647 = vadd.f32 %v550, %v632
      %v648 = vadd.f32 %v551, %v632
      %v649 = vadd.f32 %v552, %v632
      %v650 = vadd.f32 %v553, %v632
      %v651 = vadd.f32 %v554, %v632
      %v652 = vadd.f32 %v555, %v632
      %v653 = vadd.f32 %v556, %v632
      %v654 = vadd.f32 %v557, %v632
      %v655 = vadd.f32 %v558, %v632
      %v656 = vadd.f32 %v559, %v632
      %v657 = vadd.f32 %v560, %v632
      %v658 = vadd.f32 %v561, %v632
      %v659 = vadd.f32 %v562, %v632
      %v660 = vadd.f32 %v563, %v632
      %v661 = vadd.f32 %v564, %v632
      %v662 = vadd.f32 %v565, %v632
      %v663 = vadd.f32 %v566, %v632
      %v664 = vadd.f32 %v567, %v632
      %v665 = vadd.f32 %v568, %v632
      %v666 = vadd.f32 %v569, %v632
      %v667 = vadd.f32 %v570, %v632
      %v668 = vadd.f32 %v571, %v632
      %v669 = vadd.f32 %v572, %v632
      %v670 = vadd.f32 %v573, %v632
      %v671 = vadd.f32 %v574, %v636
      %v672 = vadd.f32 %v575, %v636
      %v673 = vadd.f32 %v576, %v636
      %v674 = vadd.f32 %v577, %v636
      %v675 = vadd.f32 %v578, %v636
      %v676 = vadd.f32 %v579, %v636
      %v677 = vadd.f32 %v580, %v636
      %v678 = vadd.f32 %v581, %v636
      %v679 = vadd.f32 %v582, %v636
      %v680 = vadd.f32 %v583, %v636
      %v681 = vadd.f32 %v584, %v636
      %v682 = vadd.f32 %v585, %v636
      %v683 = vadd.f32 %v586, %v636
      %v684 = vadd.f32 %v587, %v636
      %v685 = vadd.f32 %v588, %v636
      %v686 = vadd.f32 %v589, %v636
      %v687 = vadd.f32 %v590, %v636
      %v688 = vadd.f32 %v591, %v636
      %v689 = vadd.f32 %v592, %v636
      %v690 = vadd.f32 %v593, %v636
      %v691 = vadd.f32 %v594, %v636
      %v692 = vadd.f32 %v595, %v636
      %v693 = vadd.f32 %v596, %v636
      %v694 = vadd.f32 %v597, %v636
      %v695 = vadd.f32 %v598, %v636
      %v696 = vadd.f32 %v599, %v636
      %v697 = vadd.f32 %v600, %v636
      %v698 = vadd.f32 %v601, %v636
      %v699 = vadd.f32 %v602, %v636
      %v700 = vadd.f32 %v603, %v636
      %v701 = vadd.f32 %v604, %v636
      %v702 = vadd.f32 %v605, %v636
      %v703 = vmax.f32 %v639, 0.0
      %v704 = vmax.f32 %v640, 0.0
      %v705 = vmax.f32 %v641, 0.0
      %v706 = vmax.f32 %v642, 0.0
      %v707 = vmax.f32 %v643, 0.0
      %v708 = vmax.f32 %v644, 0.0
      %v709 = vmax.f32 %v645, 0.0
      %v710 = vmax.f32 %v646, 0.0
      %v711 = vmax.f32 %v647, 0.0
      %v712 = vmax.f32 %v648, 0.0
      %v713 = vmax.f32 %v649, 0.0
      %v714 = vmax.f32 %v650, 0.0
      %v715 = vmax.f32 %v651, 0.0
      %v716 = vmax.f32 %v652, 0.0
      %v717 = vmax.f32 %v653, 0.0
      %v718 = vmax.f32 %v654, 0.0
      %v719 = vmax.f32 %v655, 0.0
      %v720 = vmax.f32 %v656, 0.0
      %v721 = vmax.f32 %v657, 0.0
      %v722 = vmax.f32 %v658, 0.0
      %v723 = vmax.f32 %v659, 0.0
      %v724 = vmax.f32 %v660, 0.0
      %v725 = vmax.f32 %v661, 0.0
      %v726 = vmax.f32 %v662, 0.0
      %v727 = vmax.f32 %v663, 0.0
      %v728 = vmax.f32 %v664, 0.0
      %v729 = vmax.f32 %v665, 0.0
      %v730 = vmax.f32 %v666, 0.0
      %v731 = vmax.f32 %v667, 0.0
      %v732 = vmax.f32 %v668, 0.0
      %v733 = vmax.f32 %v669, 0.0
      %v734 = vmax.f32 %v670, 0.0
      %v735 = vmax.f32 %v671, 0.0
      %v736 = vmax.f32 %v672, 0.0
      %v737 = vmax.f32 %v673, 0.0
      %v738 = vmax.f32 %v674, 0.0
      %v739 = vmax.f32 %v675, 0.0
      %v740 = vmax.f32 %v676, 0.0
      %v741 = vmax.f32 %v677, 0.0
      %v742 = vmax.f32 %v678, 0.0
      %v743 = vmax.f32 %v679, 0.0
      %v744 = vmax.f32 %v680, 0.0
      %v745 = vmax.f32 %v681, 0.0
      %v746 = vmax.f32 %v682, 0.0
      %v747 = vmax.f32 %v683, 0.0
      %v748 = vmax.f32 %v684, 0.0
      %v749 = vmax.f32 %v685, 0.0
      %v750 = vmax.f32 %v686, 0.0
      %v751 = vmax.f32 %v687, 0.0
      %v752 = vmax.f32 %v688, 0.0
      %v753 = vmax.f32 %v689, 0.0
      %v754 = vmax.f32 %v690, 0.0
      %v755 = vmax.f32 %v691, 0.0
      %v756 = vmax.f32 %v692, 0.0
      %v757 = vmax.f32 %v693, 0.0
      %v758 = vmax.f32 %v694, 0.0
      %v759 = vmax.f32 %v695, 0.0
      %v760 = vmax.f32 %v696, 0.0
      %v761 = vmax.f32 %v697, 0.0
      %v762 = vmax.f32 %v698, 0.0
      %v763 = vmax.f32 %v699, 0.0
      %v764 = vmax.f32 %v700, 0.0
      %v765 = vmax.f32 %v701, 0.0
      %v766 = vmax.f32 %v702, 0.0
      %v768 = vlaneseq
      %v769 = vshrl.u32 %v768, 7
      %v770 = vsub.s32 0, %v769
      %v771 = vrot.slane %v111, %v770
      %v773 = vmul.f32 %v703, %v771
      %v774 = vmul.f32 %v704, %v771
      %v775 = vmul.f32 %v705, %v771
      %v776 = vmul.f32 %v706, %v771
      %v777 = vmul.f32 %v707, %v771
      %v778 = vmul.f32 %v708, %v771
      %v779 = vmul.f32 %v709, %v771
      %v780 = vmul.f32 %v710, %v771
      %v781 = vmul.f32 %v711, %v771
      %v782 = vmul.f32 %v712, %v771
      %v783 = vmul.f32 %v713, %v771
      %v784 = vmul.f32 %v714, %v771
      %v785 = vmul.f32 %v715, %v771
      %v786 = vmul.f32 %v716, %v771
      %v787 = vmul.f32 %v717, %v771
      %v788 = vmul.f32 %v718, %v771
      %v789 = vmul.f32 %v719, %v771
      %v790 = vmul.f32 %v720, %v771
      %v791 = vmul.f32 %v721, %v771
      %v792 = vmul.f32 %v722, %v771
      %v793 = vmul.f32 %v723, %v771
      %v794 = vmul.f32 %v724, %v771
      %v795 = vmul.f32 %v725, %v771
      %v796 = vmul.f32 %v726, %v771
      %v797 = vmul.f32 %v727, %v771
      %v798 = vmul.f32 %v728, %v771
      %v799 = vmul.f32 %v729, %v771
      %v800 = vmul.f32 %v730, %v771
      %v801 = vmul.f32 %v731, %v771
      %v802 = vmul.f32 %v732, %v771
      %v803 = vmul.f32 %v733, %v771
      %v804 = vmul.f32 %v734, %v771
      %v805 = vmul.f32 %v735, %v771
      %v806 = vmul.f32 %v736, %v771
      %v807 = vmul.f32 %v737, %v771
      %v808 = vmul.f32 %v738, %v771
      %v809 = vmul.f32 %v739, %v771
      %v810 = vmul.f32 %v740, %v771
      %v811 = vmul.f32 %v741, %v771
      %v812 = vmul.f32 %v742, %v771
      %v813 = vmul.f32 %v743, %v771
      %v814 = vmul.f32 %v744, %v771
      %v815 = vmul.f32 %v745, %v771
      %v816 = vmul.f32 %v746, %v771
      %v817 = vmul.f32 %v747, %v771
      %v818 = vmul.f32 %v748, %v771
      %v819 = vmul.f32 %v749, %v771
      %v820 = vmul.f32 %v750, %v771
      %v821 = vmul.f32 %v751, %v771
      %v822 = vmul.f32 %v752, %v771
      %v823 = vmul.f32 %v753, %v771
      %v824 = vmul.f32 %v754, %v771
      %v825 = vmul.f32 %v755, %v771
      %v826 = vmul.f32 %v756, %v771
      %v827 = vmul.f32 %v757, %v771
      %v828 = vmul.f32 %v758, %v771
      %v829 = vmul.f32 %v759, %v771
      %v830 = vmul.f32 %v760, %v771
      %v831 = vmul.f32 %v761, %v771
      %v832 = vmul.f32 %v762, %v771
      %v833 = vmul.f32 %v763, %v771
      %v834 = vmul.f32 %v764, %v771
      %v835 = vmul.f32 %v765, %v771
      %v836 = vmul.f32 %v766, %v771
      %837 = vadd.xlane.f32.xlu0 %v773
      %v838 = vpop.xlane.xlu0 %837
      %839 = vadd.xlane.f32.xlu0 %v774
      %v840 = vpop.xlane.xlu0 %839
      %841 = vadd.xlane.f32.xlu0 %v775
      %v842 = vpop.xlane.xlu0 %841
      %843 = vadd.xlane.f32.xlu0 %v776
      %v844 = vpop.xlane.xlu0 %843
      %845 = vadd.xlane.f32.xlu0 %v777
      %v846 = vpop.xlane.xlu0 %845
      %847 = vadd.xlane.f32.xlu0 %v778
      %v848 = vpop.xlane.xlu0 %847
      %849 = vadd.xlane.f32.xlu0 %v779
      %v850 = vpop.xlane.xlu0 %849
      %851 = vadd.xlane.f32.xlu0 %v780
      %v852 = vpop.xlane.xlu0 %851
      %853 = vadd.xlane.f32.xlu0 %v781
      %v854 = vpop.xlane.xlu0 %853
      %855 = vadd.xlane.f32.xlu0 %v782
      %v856 = vpop.xlane.xlu0 %855
      %857 = vadd.xlane.f32.xlu0 %v783
      %v858 = vpop.xlane.xlu0 %857
      %859 = vadd.xlane.f32.xlu0 %v784
      %v860 = vpop.xlane.xlu0 %859
      %861 = vadd.xlane.f32.xlu0 %v785
      %v862 = vpop.xlane.xlu0 %861
      %863 = vadd.xlane.f32.xlu0 %v786
      %v864 = vpop.xlane.xlu0 %863
      %865 = vadd.xlane.f32.xlu0 %v787
      %v866 = vpop.xlane.xlu0 %865
      %867 = vadd.xlane.f32.xlu0 %v788
      %v868 = vpop.xlane.xlu0 %867
      %869 = vadd.xlane.f32.xlu0 %v789
      %v870 = vpop.xlane.xlu0 %869
      %871 = vadd.xlane.f32.xlu0 %v790
      %v872 = vpop.xlane.xlu0 %871
      %873 = vadd.xlane.f32.xlu0 %v791
      %v874 = vpop.xlane.xlu0 %873
      %875 = vadd.xlane.f32.xlu0 %v792
      %v876 = vpop.xlane.xlu0 %875
      %877 = vadd.xlane.f32.xlu0 %v793
      %v878 = vpop.xlane.xlu0 %877
      %879 = vadd.xlane.f32.xlu0 %v794
      %v880 = vpop.xlane.xlu0 %879
      %881 = vadd.xlane.f32.xlu0 %v795
      %v882 = vpop.xlane.xlu0 %881
      %883 = vadd.xlane.f32.xlu0 %v796
      %v884 = vpop.xlane.xlu0 %883
      %885 = vadd.xlane.f32.xlu0 %v797
      %v886 = vpop.xlane.xlu0 %885
      %887 = vadd.xlane.f32.xlu0 %v798
      %v888 = vpop.xlane.xlu0 %887
      %889 = vadd.xlane.f32.xlu0 %v799
      %v890 = vpop.xlane.xlu0 %889
      %891 = vadd.xlane.f32.xlu0 %v800
      %v892 = vpop.xlane.xlu0 %891
      %893 = vadd.xlane.f32.xlu0 %v801
      %v894 = vpop.xlane.xlu0 %893
      %895 = vadd.xlane.f32.xlu0 %v802
      %v896 = vpop.xlane.xlu0 %895
      %897 = vadd.xlane.f32.xlu0 %v803
      %v898 = vpop.xlane.xlu0 %897
      %899 = vadd.xlane.f32.xlu0 %v804
      %v900 = vpop.xlane.xlu0 %899
      %901 = vadd.xlane.f32.xlu0 %v805
      %v902 = vpop.xlane.xlu0 %901
      %903 = vadd.xlane.f32.xlu0 %v806
      %v904 = vpop.xlane.xlu0 %903
      %905 = vadd.xlane.f32.xlu0 %v807
      %v906 = vpop.xlane.xlu0 %905
      %907 = vadd.xlane.f32.xlu0 %v808
      %v908 = vpop.xlane.xlu0 %907
      %909 = vadd.xlane.f32.xlu0 %v809
      %v910 = vpop.xlane.xlu0 %909
      %911 = vadd.xlane.f32.xlu0 %v810
      %v912 = vpop.xlane.xlu0 %911
      %913 = vadd.xlane.f32.xlu0 %v811
      %v914 = vpop.xlane.xlu0 %913
      %915 = vadd.xlane.f32.xlu0 %v812
      %v916 = vpop.xlane.xlu0 %915
      %917 = vadd.xlane.f32.xlu0 %v813
      %v918 = vpop.xlane.xlu0 %917
      %919 = vadd.xlane.f32.xlu0 %v814
      %v920 = vpop.xlane.xlu0 %919
      %921 = vadd.xlane.f32.xlu0 %v815
      %v922 = vpop.xlane.xlu0 %921
      %923 = vadd.xlane.f32.xlu0 %v816
      %v924 = vpop.xlane.xlu0 %923
      %925 = vadd.xlane.f32.xlu0 %v817
      %v926 = vpop.xlane.xlu0 %925
      %927 = vadd.xlane.f32.xlu0 %v818
      %v928 = vpop.xlane.xlu0 %927
      %929 = vadd.xlane.f32.xlu0 %v819
      %v930 = vpop.xlane.xlu0 %929
      %931 = vadd.xlane.f32.xlu0 %v820
      %v932 = vpop.xlane.xlu0 %931
      %933 = vadd.xlane.f32.xlu0 %v821
      %v934 = vpop.xlane.xlu0 %933
      %935 = vadd.xlane.f32.xlu0 %v822
      %v936 = vpop.xlane.xlu0 %935
      %937 = vadd.xlane.f32.xlu0 %v823
      %v938 = vpop.xlane.xlu0 %937
      %939 = vadd.xlane.f32.xlu0 %v824
      %v940 = vpop.xlane.xlu0 %939
      %941 = vadd.xlane.f32.xlu0 %v825
      %v942 = vpop.xlane.xlu0 %941
      %943 = vadd.xlane.f32.xlu0 %v826
      %v944 = vpop.xlane.xlu0 %943
      %945 = vadd.xlane.f32.xlu0 %v827
      %v946 = vpop.xlane.xlu0 %945
      %947 = vadd.xlane.f32.xlu0 %v828
      %v948 = vpop.xlane.xlu0 %947
      %949 = vadd.xlane.f32.xlu0 %v829
      %v950 = vpop.xlane.xlu0 %949
      %951 = vadd.xlane.f32.xlu0 %v830
      %v952 = vpop.xlane.xlu0 %951
      %953 = vadd.xlane.f32.xlu0 %v831
      %v954 = vpop.xlane.xlu0 %953
      %955 = vadd.xlane.f32.xlu0 %v832
      %v956 = vpop.xlane.xlu0 %955
      %957 = vadd.xlane.f32.xlu0 %v833
      %v958 = vpop.xlane.xlu0 %957
      %959 = vadd.xlane.f32.xlu0 %v834
      %v960 = vpop.xlane.xlu0 %959
      %961 = vadd.xlane.f32.xlu0 %v835
      %v962 = vpop.xlane.xlu0 %961
      %963 = vadd.xlane.f32.xlu0 %v836
      %v964 = vpop.xlane.xlu0 %963
      %v1029 = vlaneseq
      %v1030 = vshrl.u32 %v1029, 7
      %v1031 = vsub.s32 %v113, %v1030
      %v1032 = vrot.slane %v838, %v1031
      %v1033 = vadd.s32 %v113, 4294967288
      %v1034 = vlaneseq
      %v1035 = vshrl.u32 %v1034, 7
      %v1036 = vsub.s32 %v1033, %v1035
      %v1037 = vrot.slane %v840, %v1036
      %vm1038 = vcmask 130112
      %v1039 = vsel %vm1038, %v1037, %v1032
      %v1040 = vadd.s32 %v113, 4294967280
      %v1041 = vlaneseq
      %v1042 = vshrl.u32 %v1041, 7
      %v1043 = vsub.s32 %v1040, %v1042
      %v1044 = vrot.slane %v842, %v1043
      %vm1045 = vcmask 195712
      %v1046 = vsel %vm1045, %v1044, %v1039
      %v1047 = vadd.s32 %v113, 4294967272
      %v1048 = vlaneseq
      %v1049 = vshrl.u32 %v1048, 7
      %v1050 = vsub.s32 %v1047, %v1049
      %v1051 = vrot.slane %v844, %v1050
      %vm1052 = vcmask 261312
      %v1053 = vsel %vm1052, %v1051, %v1046
      %v1054 = vadd.s32 %v113, 4294967264
      %v1055 = vlaneseq
      %v1056 = vshrl.u32 %v1055, 7
      %v1057 = vsub.s32 %v1054, %v1056
      %v1058 = vrot.slane %v846, %v1057
      %vm1059 = vcmask 326912
      %v1060 = vsel %vm1059, %v1058, %v1053
      %v1061 = vadd.s32 %v113, 4294967256
      %v1062 = vlaneseq
      %v1063 = vshrl.u32 %v1062, 7
      %v1064 = vsub.s32 %v1061, %v1063
      %v1065 = vrot.slane %v848, %v1064
      %vm1066 = vcmask 392512
      %v1067 = vsel %vm1066, %v1065, %v1060
      %v1068 = vadd.s32 %v113, 4294967248
      %v1069 = vlaneseq
      %v1070 = vshrl.u32 %v1069, 7
      %v1071 = vsub.s32 %v1068, %v1070
      %v1072 = vrot.slane %v850, %v1071
      %vm1073 = vcmask 458112
      %v1074 = vsel %vm1073, %v1072, %v1067
      %v1075 = vadd.s32 %v113, 4294967240
      %v1076 = vlaneseq
      %v1077 = vshrl.u32 %v1076, 7
      %v1078 = vsub.s32 %v1075, %v1077
      %v1079 = vrot.slane %v852, %v1078
      %vm1080 = vcmask 523712
      %v1081 = vsel %vm1080, %v1079, %v1074
      %v1082 = vadd.s32 %v113, 4294967232
      %v1083 = vlaneseq
      %v1084 = vshrl.u32 %v1083, 7
      %v1085 = vsub.s32 %v1082, %v1084
      %v1086 = vrot.slane %v854, %v1085
      %vm1087 = vcmask 589312
      %v1088 = vsel %vm1087, %v1086, %v1081
      %v1089 = vadd.s32 %v113, 4294967224
      %v1090 = vlaneseq
      %v1091 = vshrl.u32 %v1090, 7
      %v1092 = vsub.s32 %v1089, %v1091
      %v1093 = vrot.slane %v856, %v1092
      %vm1094 = vcmask 654912
      %v1095 = vsel %vm1094, %v1093, %v1088
      %v1096 = vadd.s32 %v113, 4294967216
      %v1097 = vlaneseq
      %v1098 = vshrl.u32 %v1097, 7
      %v1099 = vsub.s32 %v1096, %v1098
      %v1100 = vrot.slane %v858, %v1099
      %vm1101 = vcmask 720512
      %v1102 = vsel %vm1101, %v1100, %v1095
      %v1103 = vadd.s32 %v113, 4294967208
      %v1104 = vlaneseq
      %v1105 = vshrl.u32 %v1104, 7
      %v1106 = vsub.s32 %v1103, %v1105
      %v1107 = vrot.slane %v860, %v1106
      %vm1108 = vcmask 786112
      %v1109 = vsel %vm1108, %v1107, %v1102
      %v1110 = vadd.s32 %v113, 4294967200
      %v1111 = vlaneseq
      %v1112 = vshrl.u32 %v1111, 7
      %v1113 = vsub.s32 %v1110, %v1112
      %v1114 = vrot.slane %v862, %v1113
      %vm1115 = vcmask 851712
      %v1116 = vsel %vm1115, %v1114, %v1109
      %v1117 = vadd.s32 %v113, 4294967192
      %v1118 = vlaneseq
      %v1119 = vshrl.u32 %v1118, 7
      %v1120 = vsub.s32 %v1117, %v1119
      %v1121 = vrot.slane %v864, %v1120
      %vm1122 = vcmask 917312
      %v1123 = vsel %vm1122, %v1121, %v1116
      %v1124 = vadd.s32 %v113, 4294967184
      %v1125 = vlaneseq
      %v1126 = vshrl.u32 %v1125, 7
      %v1127 = vsub.s32 %v1124, %v1126
      %v1128 = vrot.slane %v866, %v1127
      %vm1129 = vcmask 982912
      %v1130 = vsel %vm1129, %v1128, %v1123
      %v1131 = vadd.s32 %v113, 4294967176
      %v1132 = vlaneseq
      %v1133 = vshrl.u32 %v1132, 7
      %v1134 = vsub.s32 %v1131, %v1133
      %v1135 = vrot.slane %v868, %v1134
      %vm1136 = vcmask 1048512
      %v1137 = vsel %vm1136, %v1135, %v1130
      %v1138 = vlaneseq
      %v1139 = vshrl.u32 %v1138, 7
      %v1140 = vsub.s32 %v113, %v1139
      %v1141 = vrot.slane %v870, %v1140
      %v1142 = vlaneseq
      %v1143 = vshrl.u32 %v1142, 7
      %v1144 = vsub.s32 %v1033, %v1143
      %v1145 = vrot.slane %v872, %v1144
      %v1146 = vsel %vm1038, %v1145, %v1141
      %v1147 = vlaneseq
      %v1148 = vshrl.u32 %v1147, 7
      %v1149 = vsub.s32 %v1040, %v1148
      %v1150 = vrot.slane %v874, %v1149
      %v1151 = vsel %vm1045, %v1150, %v1146
      %v1152 = vlaneseq
      %v1153 = vshrl.u32 %v1152, 7
      %v1154 = vsub.s32 %v1047, %v1153
      %v1155 = vrot.slane %v876, %v1154
      %v1156 = vsel %vm1052, %v1155, %v1151
      %v1157 = vlaneseq
      %v1158 = vshrl.u32 %v1157, 7
      %v1159 = vsub.s32 %v1054, %v1158
      %v1160 = vrot.slane %v878, %v1159
      %v1161 = vsel %vm1059, %v1160, %v1156
      %v1162 = vlaneseq
      %v1163 = vshrl.u32 %v1162, 7
      %v1164 = vsub.s32 %v1061, %v1163
      %v1165 = vrot.slane %v880, %v1164
      %v1166 = vsel %vm1066, %v1165, %v1161
      %v1167 = vlaneseq
      %v1168 = vshrl.u32 %v1167, 7
      %v1169 = vsub.s32 %v1068, %v1168
      %v1170 = vrot.slane %v882, %v1169
      %v1171 = vsel %vm1073, %v1170, %v1166
      %v1172 = vlaneseq
      %v1173 = vshrl.u32 %v1172, 7
      %v1174 = vsub.s32 %v1075, %v1173
      %v1175 = vrot.slane %v884, %v1174
      %v1176 = vsel %vm1080, %v1175, %v1171
      %v1177 = vlaneseq
      %v1178 = vshrl.u32 %v1177, 7
      %v1179 = vsub.s32 %v1082, %v1178
      %v1180 = vrot.slane %v886, %v1179
      %v1181 = vsel %vm1087, %v1180, %v1176
      %v1182 = vlaneseq
      %v1183 = vshrl.u32 %v1182, 7
      %v1184 = vsub.s32 %v1089, %v1183
      %v1185 = vrot.slane %v888, %v1184
      %v1186 = vsel %vm1094, %v1185, %v1181
      %v1187 = vlaneseq
      %v1188 = vshrl.u32 %v1187, 7
      %v1189 = vsub.s32 %v1096, %v1188
      %v1190 = vrot.slane %v890, %v1189
      %v1191 = vsel %vm1101, %v1190, %v1186
      %v1192 = vlaneseq
      %v1193 = vshrl.u32 %v1192, 7
      %v1194 = vsub.s32 %v1103, %v1193
      %v1195 = vrot.slane %v892, %v1194
      %v1196 = vsel %vm1108, %v1195, %v1191
      %v1197 = vlaneseq
      %v1198 = vshrl.u32 %v1197, 7
      %v1199 = vsub.s32 %v1110, %v1198
      %v1200 = vrot.slane %v894, %v1199
      %v1201 = vsel %vm1115, %v1200, %v1196
      %v1202 = vlaneseq
      %v1203 = vshrl.u32 %v1202, 7
      %v1204 = vsub.s32 %v1117, %v1203
      %v1205 = vrot.slane %v896, %v1204
      %v1206 = vsel %vm1122, %v1205, %v1201
      %v1207 = vlaneseq
      %v1208 = vshrl.u32 %v1207, 7
      %v1209 = vsub.s32 %v1124, %v1208
      %v1210 = vrot.slane %v898, %v1209
      %v1211 = vsel %vm1129, %v1210, %v1206
      %v1212 = vlaneseq
      %v1213 = vshrl.u32 %v1212, 7
      %v1214 = vsub.s32 %v1131, %v1213
      %v1215 = vrot.slane %v900, %v1214
      %v1216 = vsel %vm1136, %v1215, %v1211
      %v1217 = vlaneseq
      %v1218 = vshrl.u32 %v1217, 7
      %v1219 = vsub.s32 %v113, %v1218
      %v1220 = vrot.slane %v902, %v1219
      %v1221 = vlaneseq
      %v1222 = vshrl.u32 %v1221, 7
      %v1223 = vsub.s32 %v1033, %v1222
      %v1224 = vrot.slane %v904, %v1223
      %v1225 = vsel %vm1038, %v1224, %v1220
      %v1226 = vlaneseq
      %v1227 = vshrl.u32 %v1226, 7
      %v1228 = vsub.s32 %v1040, %v1227
      %v1229 = vrot.slane %v906, %v1228
      %v1230 = vsel %vm1045, %v1229, %v1225
      %v1231 = vlaneseq
      %v1232 = vshrl.u32 %v1231, 7
      %v1233 = vsub.s32 %v1047, %v1232
      %v1234 = vrot.slane %v908, %v1233
      %v1235 = vsel %vm1052, %v1234, %v1230
      %v1236 = vlaneseq
      %v1237 = vshrl.u32 %v1236, 7
      %v1238 = vsub.s32 %v1054, %v1237
      %v1239 = vrot.slane %v910, %v1238
      %v1240 = vsel %vm1059, %v1239, %v1235
      %v1241 = vlaneseq
      %v1242 = vshrl.u32 %v1241, 7
      %v1243 = vsub.s32 %v1061, %v1242
      %v1244 = vrot.slane %v912, %v1243
      %v1245 = vsel %vm1066, %v1244, %v1240
      %v1246 = vlaneseq
      %v1247 = vshrl.u32 %v1246, 7
      %v1248 = vsub.s32 %v1068, %v1247
      %v1249 = vrot.slane %v914, %v1248
      %v1250 = vsel %vm1073, %v1249, %v1245
      %v1251 = vlaneseq
      %v1252 = vshrl.u32 %v1251, 7
      %v1253 = vsub.s32 %v1075, %v1252
      %v1254 = vrot.slane %v916, %v1253
      %v1255 = vsel %vm1080, %v1254, %v1250
      %v1256 = vlaneseq
      %v1257 = vshrl.u32 %v1256, 7
      %v1258 = vsub.s32 %v1082, %v1257
      %v1259 = vrot.slane %v918, %v1258
      %v1260 = vsel %vm1087, %v1259, %v1255
      %v1261 = vlaneseq
      %v1262 = vshrl.u32 %v1261, 7
      %v1263 = vsub.s32 %v1089, %v1262
      %v1264 = vrot.slane %v920, %v1263
      %v1265 = vsel %vm1094, %v1264, %v1260
      %v1266 = vlaneseq
      %v1267 = vshrl.u32 %v1266, 7
      %v1268 = vsub.s32 %v1096, %v1267
      %v1269 = vrot.slane %v922, %v1268
      %v1270 = vsel %vm1101, %v1269, %v1265
      %v1271 = vlaneseq
      %v1272 = vshrl.u32 %v1271, 7
      %v1273 = vsub.s32 %v1103, %v1272
      %v1274 = vrot.slane %v924, %v1273
      %v1275 = vsel %vm1108, %v1274, %v1270
      %v1276 = vlaneseq
      %v1277 = vshrl.u32 %v1276, 7
      %v1278 = vsub.s32 %v1110, %v1277
      %v1279 = vrot.slane %v926, %v1278
      %v1280 = vsel %vm1115, %v1279, %v1275
      %v1281 = vlaneseq
      %v1282 = vshrl.u32 %v1281, 7
      %v1283 = vsub.s32 %v1117, %v1282
      %v1284 = vrot.slane %v928, %v1283
      %v1285 = vsel %vm1122, %v1284, %v1280
      %v1286 = vlaneseq
      %v1287 = vshrl.u32 %v1286, 7
      %v1288 = vsub.s32 %v1124, %v1287
      %v1289 = vrot.slane %v930, %v1288
      %v1290 = vsel %vm1129, %v1289, %v1285
      %v1291 = vlaneseq
      %v1292 = vshrl.u32 %v1291, 7
      %v1293 = vsub.s32 %v1131, %v1292
      %v1294 = vrot.slane %v932, %v1293
      %v1295 = vsel %vm1136, %v1294, %v1290
      %v1296 = vlaneseq
      %v1297 = vshrl.u32 %v1296, 7
      %v1298 = vsub.s32 %v113, %v1297
      %v1299 = vrot.slane %v934, %v1298
      %v1300 = vlaneseq
      %v1301 = vshrl.u32 %v1300, 7
      %v1302 = vsub.s32 %v1033, %v1301
      %v1303 = vrot.slane %v936, %v1302
      %v1304 = vsel %vm1038, %v1303, %v1299
      %v1305 = vlaneseq
      %v1306 = vshrl.u32 %v1305, 7
      %v1307 = vsub.s32 %v1040, %v1306
      %v1308 = vrot.slane %v938, %v1307
      %v1309 = vsel %vm1045, %v1308, %v1304
      %v1310 = vlaneseq
      %v1311 = vshrl.u32 %v1310, 7
      %v1312 = vsub.s32 %v1047, %v1311
      %v1313 = vrot.slane %v940, %v1312
      %v1314 = vsel %vm1052, %v1313, %v1309
      %v1315 = vlaneseq
      %v1316 = vshrl.u32 %v1315, 7
      %v1317 = vsub.s32 %v1054, %v1316
      %v1318 = vrot.slane %v942, %v1317
      %v1319 = vsel %vm1059, %v1318, %v1314
      %v1320 = vlaneseq
      %v1321 = vshrl.u32 %v1320, 7
      %v1322 = vsub.s32 %v1061, %v1321
      %v1323 = vrot.slane %v944, %v1322
      %v1324 = vsel %vm1066, %v1323, %v1319
      %v1325 = vlaneseq
      %v1326 = vshrl.u32 %v1325, 7
      %v1327 = vsub.s32 %v1068, %v1326
      %v1328 = vrot.slane %v946, %v1327
      %v1329 = vsel %vm1073, %v1328, %v1324
      %v1330 = vlaneseq
      %v1331 = vshrl.u32 %v1330, 7
      %v1332 = vsub.s32 %v1075, %v1331
      %v1333 = vrot.slane %v948, %v1332
      %v1334 = vsel %vm1080, %v1333, %v1329
      %v1335 = vlaneseq
      %v1336 = vshrl.u32 %v1335, 7
      %v1337 = vsub.s32 %v1082, %v1336
      %v1338 = vrot.slane %v950, %v1337
      %v1339 = vsel %vm1087, %v1338, %v1334
      %v1340 = vlaneseq
      %v1341 = vshrl.u32 %v1340, 7
      %v1342 = vsub.s32 %v1089, %v1341
      %v1343 = vrot.slane %v952, %v1342
      %v1344 = vsel %vm1094, %v1343, %v1339
      %v1345 = vlaneseq
      %v1346 = vshrl.u32 %v1345, 7
      %v1347 = vsub.s32 %v1096, %v1346
      %v1348 = vrot.slane %v954, %v1347
      %v1349 = vsel %vm1101, %v1348, %v1344
      %v1350 = vlaneseq
      %v1351 = vshrl.u32 %v1350, 7
      %v1352 = vsub.s32 %v1103, %v1351
      %v1353 = vrot.slane %v956, %v1352
      %v1354 = vsel %vm1108, %v1353, %v1349
      %v1355 = vlaneseq
      %v1356 = vshrl.u32 %v1355, 7
      %v1357 = vsub.s32 %v1110, %v1356
      %v1358 = vrot.slane %v958, %v1357
      %v1359 = vsel %vm1115, %v1358, %v1354
      %v1360 = vlaneseq
      %v1361 = vshrl.u32 %v1360, 7
      %v1362 = vsub.s32 %v1117, %v1361
      %v1363 = vrot.slane %v960, %v1362
      %v1364 = vsel %vm1122, %v1363, %v1359
      %v1365 = vlaneseq
      %v1366 = vshrl.u32 %v1365, 7
      %v1367 = vsub.s32 %v1124, %v1366
      %v1368 = vrot.slane %v962, %v1367
      %v1369 = vsel %vm1129, %v1368, %v1364
      %v1370 = vlaneseq
      %v1371 = vshrl.u32 %v1370, 7
      %v1372 = vsub.s32 %v1131, %v1371
      %v1373 = vrot.slane %v964, %v1372
      %v1374 = vsel %vm1136, %v1373, %v1369
      %vm1375 = vcmask 1041409
      %v1376 = vsel %vm1375, %v1295, %v1137
      %v1377 = vsel %vm1375, %v1374, %v1216
      %v1380 = vsel %vm115, %v1376, -1e+30
      %v1381 = vsel %vm116, %v1377, -1e+30
      %vm1382 = vcmask 1041408
      %v1383 = vsel %vm1382, %v1380, -inf
      %v1384 = vsel %vm1382, %v1381, -inf
      %v1385 = vmax.f32 %v1383, %v1384
      %1386 = vmax.xlane.f32.xlu0 %v1385
      %v1387 = vpop.xlane.xlu0 %1386
      %v1388 = vsub.f32 %v1380, %v1387
      %v1389 = vsub.f32 %v1381, %v1387
      %v1390 = vmul.f32 %v1388, 1.442695
      %v1391 = vpow.pop %v1390
      %v1392 = vmul.f32 %v1389, 1.442695
      %v1393 = vpow.pop %v1392
      %v1394 = vsel %vm1382, %v1391, 0.0
      %v1395 = vsel %vm1382, %v1393, 0.0
      %v1396 = vadd.f32 %v1394, %v1395
      %1397 = vadd.xlane.f32.xlu0 %v1396
      %v1398 = vpop.xlane.xlu0 %1397
      %v1399 = vrcp.pop %v1398
      %v1400 = vmul.f32 %v1391, %v1399
      %v1401 = vmul.f32 %v1393, %v1399
      %v1404 = vcombine.low %v1400, %v1401
      %v1406 = vunpack.c.l.s4 1966171168
      %v1407 = vunpack.c.0.s8 %v1406
      %v1408 = vlaneseq
      %v1409 = vshrl.u32 %v1408, 7
      %v1410 = vsub.s32 %v1407, %v1409
      %v1411 = vrot.slane %v1404, %v1410
      %v1412 = vcombine.high %v1411, %v1411
      %v1414 = vunpack.c.l.s4 1966171168
      %v1415 = vunpack.c.0.s8 %v1414
      %v1416 = vlaneseq
      %v1417 = vshrl.u32 %v1416, 7
      %v1418 = vsub.s32 %v1415, %v1417
      %v1419 = vrot.slane %v1411, %v1418
      %v1421 = vunpack.c.l.s4 1966171168
      %v1422 = vunpack.c.0.s8 %v1421
      %v1423 = vlaneseq
      %v1424 = vshrl.u32 %v1423, 7
      %v1425 = vsub.s32 %v1422, %v1424
      %v1426 = vrot.slane %v1412, %v1425
      %v1427 = vlaneseq
      %v1428 = vshrl.u32 %v1427, 7
      %v1429 = vsub.s32 0, %v1428
      %v1430 = vrot.slane %v1419, %v1429
      %v1431 = vlaneseq
      %v1432 = vshrl.u32 %v1431, 7
      %v1433 = vsub.s32 1, %v1432
      %v1434 = vrot.slane %v1419, %v1433
      %v1435 = vlaneseq
      %v1436 = vshrl.u32 %v1435, 7
      %v1437 = vsub.s32 0, %v1436
      %v1438 = vrot.slane %v1426, %v1437
      %v1439 = vlaneseq
      %v1440 = vshrl.u32 %v1439, 7
      %v1441 = vsub.s32 1, %v1440
      %v1442 = vrot.slane %v1426, %v1441
      %v1447 = vpack.c.bf16 %v1430, %v1430
      %v1448 = vpack.c.bf16 %v1434, %v1434
      %v1449 = vpack.c.bf16 %v1438, %v1438
      %v1450 = vpack.c.bf16 %v1442, %v1442
      %v1451 = vld [vmem:[#allocation5] sm:$0xf]
      %v1452 = vld [vmem:[#allocation5 + $0x4] sm:$0xf]
      %v1453 = vld [vmem:[#allocation5 + $0x8] sm:$0xf]
      %v1454 = vld [vmem:[#allocation5 + $0xc] sm:$0xf]
      %v1455 = vld [vmem:[#allocation5 + $0x10] sm:$0xf]
      %v1456 = vld [vmem:[#allocation5 + $0x14] sm:$0xf]
      %v1457 = vld [vmem:[#allocation5 + $0x18] sm:$0xf]
      %v1458 = vld [vmem:[#allocation5 + $0x1c] sm:$0xf]
      %v1459 = vld [vmem:[#allocation5 + $0x20] sm:$0xf]
      %v1460 = vld [vmem:[#allocation5 + $0x24] sm:$0xf]
      %v1461 = vld [vmem:[#allocation5 + $0x28] sm:$0xf]
      %v1462 = vld [vmem:[#allocation5 + $0x2c] sm:$0xf]
      %v1463 = vld [vmem:[#allocation5 + $0x30] sm:$0xf]
      %v1464 = vld [vmem:[#allocation5 + $0x34] sm:$0xf]
      %v1465 = vld [vmem:[#allocation5 + $0x38] sm:$0xf]
      %v1466 = vld [vmem:[#allocation5 + $0x3c] sm:$0xf]
      %v1467 = vld [vmem:[#allocation5 + $0x40] sm:$0xf]
      %v1468 = vld [vmem:[#allocation5 + $0x44] sm:$0xf]
      %v1469 = vld [vmem:[#allocation5 + $0x48] sm:$0xf]
      %v1470 = vld [vmem:[#allocation5 + $0x4c] sm:$0xf]
      %v1471 = vld [vmem:[#allocation5 + $0x50] sm:$0xf]
      %v1472 = vld [vmem:[#allocation5 + $0x54] sm:$0xf]
      %v1473 = vld [vmem:[#allocation5 + $0x58] sm:$0xf]
      %v1474 = vld [vmem:[#allocation5 + $0x5c] sm:$0xf]
      %v1475 = vld [vmem:[#allocation5 + $0x60] sm:$0xf]
      %v1476 = vld [vmem:[#allocation5 + $0x64] sm:$0xf]
      %v1477 = vld [vmem:[#allocation5 + $0x68] sm:$0xf]
      %v1478 = vld [vmem:[#allocation5 + $0x6c] sm:$0xf]
      %v1479 = vld [vmem:[#allocation5 + $0x70] sm:$0xf]
      %v1480 = vld [vmem:[#allocation5 + $0x74] sm:$0xf]
      %v1481 = vld [vmem:[#allocation5 + $0x78] sm:$0xf]
      %v1482 = vld [vmem:[#allocation5 + $0x7c] sm:$0xf]
      %v1483 = vld [vmem:[#allocation5 + $0x80] sm:$0xf]
      %v1484 = vld [vmem:[#allocation5 + $0x84] sm:$0xf]
      %v1485 = vld [vmem:[#allocation5 + $0x88] sm:$0xf]
      %v1486 = vld [vmem:[#allocation5 + $0x8c] sm:$0xf]
      %v1487 = vld [vmem:[#allocation5 + $0x90] sm:$0xf]
      %v1488 = vld [vmem:[#allocation5 + $0x94] sm:$0xf]
      %v1489 = vld [vmem:[#allocation5 + $0x98] sm:$0xf]
      %v1490 = vld [vmem:[#allocation5 + $0x9c] sm:$0xf]
      %v1491 = vld [vmem:[#allocation5 + $0xa0] sm:$0xf]
      %v1492 = vld [vmem:[#allocation5 + $0xa4] sm:$0xf]
      %v1493 = vld [vmem:[#allocation5 + $0xa8] sm:$0xf]
      %v1494 = vld [vmem:[#allocation5 + $0xac] sm:$0xf]
      %v1495 = vld [vmem:[#allocation5 + $0xb0] sm:$0xf]
      %v1496 = vld [vmem:[#allocation5 + $0xb4] sm:$0xf]
      %v1497 = vld [vmem:[#allocation5 + $0xb8] sm:$0xf]
      %v1498 = vld [vmem:[#allocation5 + $0xbc] sm:$0xf]
      %v1499 = vld [vmem:[#allocation5 + $0xc0] sm:$0xf]
      %v1500 = vld [vmem:[#allocation5 + $0xc4] sm:$0xf]
      %v1501 = vld [vmem:[#allocation5 + $0xc8] sm:$0xf]
      %v1502 = vld [vmem:[#allocation5 + $0xcc] sm:$0xf]
      %v1503 = vld [vmem:[#allocation5 + $0xd0] sm:$0xf]
      %v1504 = vld [vmem:[#allocation5 + $0xd4] sm:$0xf]
      %v1505 = vld [vmem:[#allocation5 + $0xd8] sm:$0xf]
      %v1506 = vld [vmem:[#allocation5 + $0xdc] sm:$0xf]
      %v1507 = vld [vmem:[#allocation5 + $0xe0] sm:$0xf]
      %v1508 = vld [vmem:[#allocation5 + $0xe4] sm:$0xf]
      %v1509 = vld [vmem:[#allocation5 + $0xe8] sm:$0xf]
      %v1510 = vld [vmem:[#allocation5 + $0xec] sm:$0xf]
      %v1511 = vld [vmem:[#allocation5 + $0xf0] sm:$0xf]
      %v1512 = vld [vmem:[#allocation5 + $0xf4] sm:$0xf]
      %v1513 = vld [vmem:[#allocation5 + $0xf8] sm:$0xf]
      %v1514 = vld [vmem:[#allocation5 + $0xfc] sm:$0xf]
      %v1547 = vunpack.c.l.b16 %v1451
      %v1548 = vunpack.c.l.b16 %v1452
      %v1549 = vunpack.c.l.b16 %v1453
      %v1550 = vunpack.c.l.b16 %v1454
      %v1551 = vunpack.c.l.b16 %v1455
      %v1552 = vunpack.c.l.b16 %v1456
      %v1553 = vunpack.c.l.b16 %v1457
      %v1554 = vunpack.c.l.b16 %v1458
      %v1555 = vunpack.c.l.b16 %v1459
      %v1556 = vunpack.c.l.b16 %v1460
      %v1557 = vunpack.c.l.b16 %v1461
      %v1558 = vunpack.c.l.b16 %v1462
      %v1559 = vunpack.c.l.b16 %v1463
      %v1560 = vunpack.c.l.b16 %v1464
      %v1561 = vunpack.c.l.b16 %v1465
      %v1562 = vunpack.c.l.b16 %v1466
      %v1563 = vunpack.c.l.b16 %v1467
      %v1564 = vunpack.c.l.b16 %v1468
      %v1565 = vunpack.c.l.b16 %v1469
      %v1566 = vunpack.c.l.b16 %v1470
      %v1567 = vunpack.c.l.b16 %v1471
      %v1568 = vunpack.c.l.b16 %v1472
      %v1569 = vunpack.c.l.b16 %v1473
      %v1570 = vunpack.c.l.b16 %v1474
      %v1571 = vunpack.c.l.b16 %v1475
      %v1572 = vunpack.c.l.b16 %v1476
      %v1573 = vunpack.c.l.b16 %v1477
      %v1574 = vunpack.c.l.b16 %v1478
      %v1575 = vunpack.c.l.b16 %v1479
      %v1576 = vunpack.c.l.b16 %v1480
      %v1577 = vunpack.c.l.b16 %v1481
      %v1578 = vunpack.c.l.b16 %v1482
      %v1579 = vpack.c.b16 %v1548, %v1547
      %v1580 = vpack.c.b16 %v1550, %v1549
      %v1581 = vpack.c.b16 %v1552, %v1551
      %v1582 = vpack.c.b16 %v1554, %v1553
      %v1583 = vpack.c.b16 %v1556, %v1555
      %v1584 = vpack.c.b16 %v1558, %v1557
      %v1585 = vpack.c.b16 %v1560, %v1559
      %v1586 = vpack.c.b16 %v1562, %v1561
      %v1587 = vpack.c.b16 %v1564, %v1563
      %v1588 = vpack.c.b16 %v1566, %v1565
      %v1589 = vpack.c.b16 %v1568, %v1567
      %v1590 = vpack.c.b16 %v1570, %v1569
      %v1591 = vpack.c.b16 %v1572, %v1571
      %v1592 = vpack.c.b16 %v1574, %v1573
      %v1593 = vpack.c.b16 %v1576, %v1575
      %v1594 = vpack.c.b16 %v1578, %v1577
      %1611 = vmatprep.subr.bf16.mxu0 0
      %1612 = vmatpush1.bf16.msra.mxu0 %v1586
      %1613 = vmatprep.subr.bf16.mxu0 0
      %1614 = vmatpush1.bf16.msra.mxu0 %v1585
      %1615 = vmatprep.subr.bf16.mxu0 0
      %1616 = vmatpush1.bf16.msra.mxu0 %v1584
      %1617 = vmatprep.subr.bf16.mxu0 0
      %1618 = vmatpush1.bf16.msra.mxu0 %v1583
      %1619 = vmatprep.subr.bf16.mxu0 0
      %1620 = vmatpush1.bf16.msra.mxu0 %v1582
      %1621 = vmatprep.subr.bf16.mxu0 0
      %1622 = vmatpush1.bf16.msra.mxu0 %v1581
      %1623 = vmatprep.subr.bf16.mxu0 0
      %1624 = vmatpush1.bf16.msra.mxu0 %v1580
      %1625 = vmatprep.subr.bf16.mxu0 0
      %1626 = vmatpush1.bf16.msra.mxu0 %v1579
      %1627 = vmatprep.subr.bf16.mxu0 0
      %1628 = vmatpush2.bf16.msra.mxu0 %v1594
      %1629 = vmatprep.subr.bf16.mxu0 0
      %1630 = vmatpush2.bf16.msra.mxu0 %v1593
      %1631 = vmatprep.subr.bf16.mxu0 0
      %1632 = vmatpush2.bf16.msra.mxu0 %v1592
      %1633 = vmatprep.subr.bf16.mxu0 0
      %1634 = vmatpush2.bf16.msra.mxu0 %v1591
      %1635 = vmatprep.subr.bf16.mxu0 0
      %1636 = vmatpush2.bf16.msra.mxu0 %v1590
      %1637 = vmatprep.subr.bf16.mxu0 0
      %1638 = vmatpush2.bf16.msra.mxu0 %v1589
      %1639 = vmatprep.subr.bf16.mxu0 0
      %1640 = vmatpush2.bf16.msra.mxu0 %v1588
      %1641 = vmatprep.subr.bf16.mxu0 0
      %1642 = vmatpush2.bf16.msra.mxu0 %v1587
      %1643 = vmatprep.mubr.bf16.mxu0 %v1448
      %1644 = vmatmul.mubr.bf16.gmra.mxu0 %v1447
      %v1645 = vpop.f32.mrf.mxu0
      %v1646 = vadd.f32 0.0, %v1645
      %v1647 = vpop.f32.mrf.mxu0
      %v1648 = vpop.f32.mrf.mxu0
      %v1649 = vpop.f32.mrf.mxu0
      %1650 = vdwg.mxu0
      %v1683 = vunpack.c.l.b16 %v1483
      %v1684 = vunpack.c.l.b16 %v1484
      %v1685 = vunpack.c.l.b16 %v1485
      %v1686 = vunpack.c.l.b16 %v1486
      %v1687 = vunpack.c.l.b16 %v1487
      %v1688 = vunpack.c.l.b16 %v1488
      %v1689 = vunpack.c.l.b16 %v1489
      %v1690 = vunpack.c.l.b16 %v1490
      %v1691 = vunpack.c.l.b16 %v1491
      %v1692 = vunpack.c.l.b16 %v1492
      %v1693 = vunpack.c.l.b16 %v1493
      %v1694 = vunpack.c.l.b16 %v1494
      %v1695 = vunpack.c.l.b16 %v1495
      %v1696 = vunpack.c.l.b16 %v1496
      %v1697 = vunpack.c.l.b16 %v1497
      %v1698 = vunpack.c.l.b16 %v1498
      %v1699 = vunpack.c.l.b16 %v1499
      %v1700 = vunpack.c.l.b16 %v1500
      %v1701 = vunpack.c.l.b16 %v1501
      %v1702 = vunpack.c.l.b16 %v1502
      %v1703 = vunpack.c.l.b16 %v1503
      %v1704 = vunpack.c.l.b16 %v1504
      %v1705 = vunpack.c.l.b16 %v1505
      %v1706 = vunpack.c.l.b16 %v1506
      %v1707 = vunpack.c.l.b16 %v1507
      %v1708 = vunpack.c.l.b16 %v1508
      %v1709 = vunpack.c.l.b16 %v1509
      %v1710 = vunpack.c.l.b16 %v1510
      %v1711 = vunpack.c.l.b16 %v1511
      %v1712 = vunpack.c.l.b16 %v1512
      %v1713 = vunpack.c.l.b16 %v1513
      %v1714 = vunpack.c.l.b16 %v1514
      %v1715 = vpack.c.b16 %v1684, %v1683
      %v1716 = vpack.c.b16 %v1686, %v1685
      %v1717 = vpack.c.b16 %v1688, %v1687
      %v1718 = vpack.c.b16 %v1690, %v1689
      %v1719 = vpack.c.b16 %v1692, %v1691
      %v1720 = vpack.c.b16 %v1694, %v1693
      %v1721 = vpack.c.b16 %v1696, %v1695
      %v1722 = vpack.c.b16 %v1698, %v1697
      %v1723 = vpack.c.b16 %v1700, %v1699
      %v1724 = vpack.c.b16 %v1702, %v1701
      %v1725 = vpack.c.b16 %v1704, %v1703
      %v1726 = vpack.c.b16 %v1706, %v1705
      %v1727 = vpack.c.b16 %v1708, %v1707
      %v1728 = vpack.c.b16 %v1710, %v1709
      %v1729 = vpack.c.b16 %v1712, %v1711
      %v1730 = vpack.c.b16 %v1714, %v1713
      %1747 = vmatprep.subr.bf16.mxu0 0
      %1748 = vmatpush1.bf16.msra.mxu0 %v1722
      %1749 = vmatprep.subr.bf16.mxu0 0
      %1750 = vmatpush1.bf16.msra.mxu0 %v1721
      %1751 = vmatprep.subr.bf16.mxu0 0
      %1752 = vmatpush1.bf16.msra.mxu0 %v1720
      %1753 = vmatprep.subr.bf16.mxu0 0
      %1754 = vmatpush1.bf16.msra.mxu0 %v1719
      %1755 = vmatprep.subr.bf16.mxu0 0
      %1756 = vmatpush1.bf16.msra.mxu0 %v1718
      %1757 = vmatprep.subr.bf16.mxu0 0
      %1758 = vmatpush1.bf16.msra.mxu0 %v1717
      %1759 = vmatprep.subr.bf16.mxu0 0
      %1760 = vmatpush1.bf16.msra.mxu0 %v1716
      %1761 = vmatprep.subr.bf16.mxu0 0
      %1762 = vmatpush1.bf16.msra.mxu0 %v1715
      %1763 = vmatprep.subr.bf16.mxu0 0
      %1764 = vmatpush2.bf16.msra.mxu0 %v1730
      %1765 = vmatprep.subr.bf16.mxu0 0
      %1766 = vmatpush2.bf16.msra.mxu0 %v1729
      %1767 = vmatprep.subr.bf16.mxu0 0
      %1768 = vmatpush2.bf16.msra.mxu0 %v1728
      %1769 = vmatprep.subr.bf16.mxu0 0
      %1770 = vmatpush2.bf16.msra.mxu0 %v1727
      %1771 = vmatprep.subr.bf16.mxu0 0
      %1772 = vmatpush2.bf16.msra.mxu0 %v1726
      %1773 = vmatprep.subr.bf16.mxu0 0
      %1774 = vmatpush2.bf16.msra.mxu0 %v1725
      %1775 = vmatprep.subr.bf16.mxu0 0
      %1776 = vmatpush2.bf16.msra.mxu0 %v1724
      %1777 = vmatprep.subr.bf16.mxu0 0
      %1778 = vmatpush2.bf16.msra.mxu0 %v1723
      %1779 = vmatprep.mubr.bf16.mxu0 %v1450
      %1780 = vmatmul.mubr.bf16.gmra.mxu0 %v1449
      %v1781 = vpop.f32.mrf.mxu0
      %v1782 = vadd.f32 0.0, %v1781
      %v1783 = vpop.f32.mrf.mxu0
      %v1784 = vpop.f32.mrf.mxu0
      %v1785 = vpop.f32.mrf.mxu0
      %1786 = vdwg.mxu0
      %v1787 = vld [vmem:[%s4] sm:$0x1]
      %v1789 = vlaneseq
      %v1790 = vshrl.u32 %v1789, 7
      %v1791 = vsub.s32 0, %v1790
      %v1792 = vrot.slane %v1787, %v1791
      %v1794 = vadd.f32 %v456, %v1792
      %v1795 = vxor.u32 %v1794, 2147483648
      %v1796 = vmul.f32 %v1795, 1.442695
      %v1797 = vpow.pop %v1796
      %v1798 = vadd.f32 %v1797, 1.0
      %v1799 = vrcp.pop %v1798
      %v1800 = vmul.f32 1.0, %v1799
      %v1803 = vrot.slane %v1782, 7
      %v1804 = vsel %vm1375, %v1803, %v1646
      %v1806 = vmul.f32 %v1800, %v1804
      %s1807 = smul.u32 %s120, 4
      %s1808 = smul.addr %s1807, 2
      %s1809 = scalar_lea.vmem [#allocation10], %s1808
      %v1810 = vld [vmem:[%s1809] sm:$0xff]
      %v1812 = vcombine.high %v1810, %v1810
      %v1814 = vunpack.c.l.s4 1983009808
      %v1815 = vunpack.c.0.s8 %v1814
      %v1816 = vlaneseq
      %v1817 = vshrl.u32 %v1816, 7
      %v1818 = vsub.s32 %v1815, %v1817
      %v1819 = vrot.slane %v1810, %v1818
      %v1821 = vunpack.c.l.s4 1983009808
      %v1822 = vunpack.c.0.s8 %v1821
      %v1823 = vlaneseq
      %v1824 = vshrl.u32 %v1823, 7
      %v1825 = vsub.s32 %v1822, %v1824
      %v1826 = vrot.slane %v1812, %v1825
      %v1827 = vcombine.high %v1819, %v1819
      %v1828 = vcombine.high %v1826, %v1826
      %v1833 = vadd.f32 %v495, %v1819
      %v1834 = vadd.f32 %v497, %v1827
      %v1835 = vadd.f32 %v536, %v1826
      %v1836 = vadd.f32 %v538, %v1828
      %v1837 = vpack.c.bf16 %v1806, %v1806
      %v1838 = vld [vmem:[#allocation8] sm:$0xff]
      %v1839 = vld [vmem:[#allocation8 + $0x8] sm:$0xff]
      %v1840 = vld [vmem:[#allocation8 + $0x10] sm:$0xff]
      %v1841 = vld [vmem:[#allocation8 + $0x18] sm:$0xff]
      %v1842 = vld [vmem:[#allocation8 + $0x20] sm:$0xff]
      %v1843 = vld [vmem:[#allocation8 + $0x28] sm:$0xff]
      %v1844 = vld [vmem:[#allocation8 + $0x30] sm:$0xff]
      %v1845 = vld [vmem:[#allocation8 + $0x38] sm:$0xff]
      %v1846 = vld [vmem:[#allocation8 + $0x40] sm:$0xff]
      %v1847 = vld [vmem:[#allocation8 + $0x48] sm:$0xff]
      %v1848 = vld [vmem:[#allocation8 + $0x50] sm:$0xff]
      %v1849 = vld [vmem:[#allocation8 + $0x58] sm:$0xff]
      %v1850 = vld [vmem:[#allocation8 + $0x60] sm:$0xff]
      %v1851 = vld [vmem:[#allocation8 + $0x68] sm:$0xff]
      %v1852 = vld [vmem:[#allocation8 + $0x70] sm:$0xff]
      %v1853 = vld [vmem:[#allocation8 + $0x78] sm:$0xff]
      %v1854 = vld [vmem:[#allocation8 + $0x80] sm:$0xff]
      %v1855 = vld [vmem:[#allocation8 + $0x88] sm:$0xff]
      %v1856 = vld [vmem:[#allocation8 + $0x90] sm:$0xff]
      %v1857 = vld [vmem:[#allocation8 + $0x98] sm:$0xff]
      %v1858 = vld [vmem:[#allocation8 + $0xa0] sm:$0xff]
      %v1859 = vld [vmem:[#allocation8 + $0xa8] sm:$0xff]
      %v1860 = vld [vmem:[#allocation8 + $0xb0] sm:$0xff]
      %v1861 = vld [vmem:[#allocation8 + $0xb8] sm:$0xff]
      %v1862 = vld [vmem:[#allocation8 + $0xc0] sm:$0xff]
      %v1863 = vld [vmem:[#allocation8 + $0xc8] sm:$0xff]
      %v1864 = vld [vmem:[#allocation8 + $0xd0] sm:$0xff]
      %v1865 = vld [vmem:[#allocation8 + $0xd8] sm:$0xff]
      %v1866 = vld [vmem:[#allocation8 + $0xe0] sm:$0xff]
      %v1867 = vld [vmem:[#allocation8 + $0xe8] sm:$0xff]
      %v1868 = vld [vmem:[#allocation8 + $0xf0] sm:$0xff]
      %v1869 = vld [vmem:[#allocation8 + $0xf8] sm:$0xff]
      %v1902 = vunpack.c.l.b16 %v1838
      %v1903 = vunpack.c.h.b16 %v1838
      %v1904 = vunpack.c.l.b16 %v1839
      %v1905 = vunpack.c.h.b16 %v1839
      %v1906 = vunpack.c.l.b16 %v1840
      %v1907 = vunpack.c.h.b16 %v1840
      %v1908 = vunpack.c.l.b16 %v1841
      %v1909 = vunpack.c.h.b16 %v1841
      %v1910 = vunpack.c.l.b16 %v1842
      %v1911 = vunpack.c.h.b16 %v1842
      %v1912 = vunpack.c.l.b16 %v1843
      %v1913 = vunpack.c.h.b16 %v1843
      %v1914 = vunpack.c.l.b16 %v1844
      %v1915 = vunpack.c.h.b16 %v1844
      %v1916 = vunpack.c.l.b16 %v1845
      %v1917 = vunpack.c.h.b16 %v1845
      %v1918 = vunpack.c.l.b16 %v1846
      %v1919 = vunpack.c.h.b16 %v1846
      %v1920 = vunpack.c.l.b16 %v1847
      %v1921 = vunpack.c.h.b16 %v1847
      %v1922 = vunpack.c.l.b16 %v1848
      %v1923 = vunpack.c.h.b16 %v1848
      %v1924 = vunpack.c.l.b16 %v1849
      %v1925 = vunpack.c.h.b16 %v1849
      %v1926 = vunpack.c.l.b16 %v1850
      %v1927 = vunpack.c.h.b16 %v1850
      %v1928 = vunpack.c.l.b16 %v1851
      %v1929 = vunpack.c.h.b16 %v1851
      %v1930 = vunpack.c.l.b16 %v1852
      %v1931 = vunpack.c.h.b16 %v1852
      %v1932 = vunpack.c.l.b16 %v1853
      %v1933 = vunpack.c.h.b16 %v1853
      %v1934 = vunpack.c.l.b16 %v1854
      %v1935 = vunpack.c.h.b16 %v1854
      %v1936 = vunpack.c.l.b16 %v1855
      %v1937 = vunpack.c.h.b16 %v1855
      %v1938 = vunpack.c.l.b16 %v1856
      %v1939 = vunpack.c.h.b16 %v1856
      %v1940 = vunpack.c.l.b16 %v1857
      %v1941 = vunpack.c.h.b16 %v1857
      %v1942 = vunpack.c.l.b16 %v1858
      %v1943 = vunpack.c.h.b16 %v1858
      %v1944 = vunpack.c.l.b16 %v1859
      %v1945 = vunpack.c.h.b16 %v1859
      %v1946 = vunpack.c.l.b16 %v1860
      %v1947 = vunpack.c.h.b16 %v1860
      %v1948 = vunpack.c.l.b16 %v1861
      %v1949 = vunpack.c.h.b16 %v1861
      %v1950 = vunpack.c.l.b16 %v1862
      %v1951 = vunpack.c.h.b16 %v1862
      %v1952 = vunpack.c.l.b16 %v1863
      %v1953 = vunpack.c.h.b16 %v1863
      %v1954 = vunpack.c.l.b16 %v1864
      %v1955 = vunpack.c.h.b16 %v1864
      %v1956 = vunpack.c.l.b16 %v1865
      %v1957 = vunpack.c.h.b16 %v1865
      %v1958 = vunpack.c.l.b16 %v1866
      %v1959 = vunpack.c.h.b16 %v1866
      %v1960 = vunpack.c.l.b16 %v1867
      %v1961 = vunpack.c.h.b16 %v1867
      %v1962 = vunpack.c.l.b16 %v1868
      %v1963 = vunpack.c.h.b16 %v1868
      %v1964 = vunpack.c.l.b16 %v1869
      %v1965 = vunpack.c.h.b16 %v1869
      %v1966 = vpack.c.b16 %v1906, %v1902
      %v1967 = vpack.c.b16 %v1907, %v1903
      %v1968 = vpack.c.b16 %v1908, %v1904
      %v1969 = vpack.c.b16 %v1909, %v1905
      %v1970 = vpack.c.b16 %v1914, %v1910
      %v1971 = vpack.c.b16 %v1915, %v1911
      %v1972 = vpack.c.b16 %v1916, %v1912
      %v1973 = vpack.c.b16 %v1917, %v1913
      %v1974 = vpack.c.b16 %v1922, %v1918
      %v1975 = vpack.c.b16 %v1923, %v1919
      %v1976 = vpack.c.b16 %v1924, %v1920
      %v1977 = vpack.c.b16 %v1925, %v1921
      %v1978 = vpack.c.b16 %v1930, %v1926
      %v1979 = vpack.c.b16 %v1931, %v1927
      %v1980 = vpack.c.b16 %v1932, %v1928
      %v1981 = vpack.c.b16 %v1933, %v1929
      %v1982 = vpack.c.b16 %v1938, %v1934
      %v1983 = vpack.c.b16 %v1939, %v1935
      %v1984 = vpack.c.b16 %v1940, %v1936
      %v1985 = vpack.c.b16 %v1941, %v1937
      %v1986 = vpack.c.b16 %v1946, %v1942
      %v1987 = vpack.c.b16 %v1947, %v1943
      %v1988 = vpack.c.b16 %v1948, %v1944
      %v1989 = vpack.c.b16 %v1949, %v1945
      %v1990 = vpack.c.b16 %v1954, %v1950
      %v1991 = vpack.c.b16 %v1955, %v1951
      %v1992 = vpack.c.b16 %v1956, %v1952
      %v1993 = vpack.c.b16 %v1957, %v1953
      %v1994 = vpack.c.b16 %v1962, %v1958
      %v1995 = vpack.c.b16 %v1963, %v1959
      %v1996 = vpack.c.b16 %v1964, %v1960
      %v1997 = vpack.c.b16 %v1965, %v1961
      %2030 = vmatprep.subr.bf16.mxu0 %v1995
      %2031 = vmatpush1.bf16.msra.mxu0 %v1994
      %2032 = vmatprep.subr.bf16.mxu0 %v1991
      %2033 = vmatpush1.bf16.msra.mxu0 %v1990
      %2034 = vmatprep.subr.bf16.mxu0 %v1987
      %2035 = vmatpush1.bf16.msra.mxu0 %v1986
      %2036 = vmatprep.subr.bf16.mxu0 %v1983
      %2037 = vmatpush1.bf16.msra.mxu0 %v1982
      %2038 = vmatprep.subr.bf16.mxu0 %v1979
      %2039 = vmatpush1.bf16.msra.mxu0 %v1978
      %2040 = vmatprep.subr.bf16.mxu0 %v1975
      %2041 = vmatpush1.bf16.msra.mxu0 %v1974
      %2042 = vmatprep.subr.bf16.mxu0 %v1971
      %2043 = vmatpush1.bf16.msra.mxu0 %v1970
      %2044 = vmatprep.subr.bf16.mxu0 %v1967
      %2045 = vmatpush1.bf16.msra.mxu0 %v1966
      %2046 = vmatprep.subr.bf16.mxu0 0
      %2047 = vmatpush2.bf16.msra.mxu0 0
      %2048 = vmatprep.subr.bf16.mxu0 0
      %2049 = vmatpush2.bf16.msra.mxu0 0
      %2050 = vmatprep.subr.bf16.mxu0 0
      %2051 = vmatpush2.bf16.msra.mxu0 0
      %2052 = vmatprep.subr.bf16.mxu0 0
      %2053 = vmatpush2.bf16.msra.mxu0 0
      %2054 = vmatprep.subr.bf16.mxu0 0
      %2055 = vmatpush2.bf16.msra.mxu0 0
      %2056 = vmatprep.subr.bf16.mxu0 0
      %2057 = vmatpush2.bf16.msra.mxu0 0
      %2058 = vmatprep.subr.bf16.mxu0 0
      %2059 = vmatpush2.bf16.msra.mxu0 0
      %2060 = vmatprep.subr.bf16.mxu0 0
      %2061 = vmatpush2.bf16.msra.mxu0 0
      %2062 = vmatprep.mubr.bf16.mxu0 0
      %2063 = vmatmul.mubr.bf16.gmra.mxu0 %v1837
      %v2064 = vpop.f32.mrf.mxu0
      %v2065 = vadd.f32 0.0, %v2064
      %v2066 = vpop.f32.mrf.mxu0
      %v2067 = vadd.f32 0.0, %v2066
      %v2068 = vpop.f32.mrf.mxu0
      %v2069 = vpop.f32.mrf.mxu0
      %2070 = vdwg.mxu0
      %2071 = vmatprep.subr.bf16.mxu0 %v1997
      %2072 = vmatpush1.bf16.msra.mxu0 %v1996
      %2073 = vmatprep.subr.bf16.mxu0 %v1993
      %2074 = vmatpush1.bf16.msra.mxu0 %v1992
      %2075 = vmatprep.subr.bf16.mxu0 %v1989
      %2076 = vmatpush1.bf16.msra.mxu0 %v1988
      %2077 = vmatprep.subr.bf16.mxu0 %v1985
      %2078 = vmatpush1.bf16.msra.mxu0 %v1984
      %2079 = vmatprep.subr.bf16.mxu0 %v1981
      %2080 = vmatpush1.bf16.msra.mxu0 %v1980
      %2081 = vmatprep.subr.bf16.mxu0 %v1977
      %2082 = vmatpush1.bf16.msra.mxu0 %v1976
      %2083 = vmatprep.subr.bf16.mxu0 %v1973
      %2084 = vmatpush1.bf16.msra.mxu0 %v1972
      %2085 = vmatprep.subr.bf16.mxu0 %v1969
      %2086 = vmatpush1.bf16.msra.mxu0 %v1968
      %2087 = vmatprep.subr.bf16.mxu0 0
      %2088 = vmatpush2.bf16.msra.mxu0 0
      %2089 = vmatprep.subr.bf16.mxu0 0
      %2090 = vmatpush2.bf16.msra.mxu0 0
      %2091 = vmatprep.subr.bf16.mxu0 0
      %2092 = vmatpush2.bf16.msra.mxu0 0
      %2093 = vmatprep.subr.bf16.mxu0 0
      %2094 = vmatpush2.bf16.msra.mxu0 0
      %2095 = vmatprep.subr.bf16.mxu0 0
      %2096 = vmatpush2.bf16.msra.mxu0 0
      %2097 = vmatprep.subr.bf16.mxu0 0
      %2098 = vmatpush2.bf16.msra.mxu0 0
      %2099 = vmatprep.subr.bf16.mxu0 0
      %2100 = vmatpush2.bf16.msra.mxu0 0
      %2101 = vmatprep.subr.bf16.mxu0 0
      %2102 = vmatpush2.bf16.msra.mxu0 0
      %2103 = vmatprep.mubr.bf16.mxu0 0
      %2104 = vmatmul.mubr.bf16.gmra.mxu0 %v1837
      %v2105 = vpop.f32.mrf.mxu0
      %v2106 = vadd.f32 0.0, %v2105
      %v2107 = vpop.f32.mrf.mxu0
      %v2108 = vadd.f32 0.0, %v2107
      %v2109 = vpop.f32.mrf.mxu0
      %v2110 = vpop.f32.mrf.mxu0
      %2111 = vdwg.mxu0
      %v2112 = vadd.f32 %v1833, %v2065
      %v2113 = vadd.f32 %v1834, %v2067
      %v2114 = vadd.f32 %v1835, %v2106
      %v2115 = vadd.f32 %v1836, %v2108
      %v2116 = vld [vmem:[%s6] sm:$0xf]
      %v2118 = vlaneseq
      %v2119 = vshrl.u32 %v2118, 7
      %v2120 = vsub.s32 0, %v2119
      %v2121 = vrot.slane %v2116, %v2120
      %v2122 = vlaneseq
      %v2123 = vshrl.u32 %v2122, 7
      %v2124 = vsub.s32 1, %v2123
      %v2125 = vrot.slane %v2116, %v2124
      %v2126 = vlaneseq
      %v2127 = vshrl.u32 %v2126, 7
      %v2128 = vsub.s32 2, %v2127
      %v2129 = vrot.slane %v2116, %v2128
      %v2130 = vlaneseq
      %v2131 = vshrl.u32 %v2130, 7
      %v2132 = vsub.s32 3, %v2131
      %v2133 = vrot.slane %v2116, %v2132
      %v2138 = vadd.f32 %v2112, %v2121
      %v2139 = vadd.f32 %v2113, %v2125
      %v2140 = vadd.f32 %v2114, %v2129
      %v2141 = vadd.f32 %v2115, %v2133
      %v2142 = vxor.u32 %v2138, 2147483648
      %v2143 = vmul.f32 %v2142, 1.442695
      %v2144 = vpow.pop %v2143
      %v2145 = vadd.f32 %v2144, 1.0
      %v2146 = vrcp.pop %v2145
      %v2147 = vmul.f32 1.0, %v2146
      %v2148 = vxor.u32 %v2139, 2147483648
      %v2149 = vmul.f32 %v2148, 1.442695
      %v2150 = vpow.pop %v2149
      %v2151 = vadd.f32 %v2150, 1.0
      %v2152 = vrcp.pop %v2151
      %v2153 = vmul.f32 1.0, %v2152
      %v2154 = vtanh.pop %v2140
      %v2155 = vxor.u32 %v2141, 2147483648
      %v2156 = vmul.f32 %v2155, 1.442695
      %v2157 = vpow.pop %v2156
      %v2158 = vadd.f32 %v2157, 1.0
      %v2159 = vrcp.pop %v2158
      %v2160 = vmul.f32 1.0, %v2159
      %v2161 = vmul.f32 %v2153, %v126
      %v2162 = vmul.f32 %v2147, %v2154
      %v2163 = vadd.f32 %v2161, %v2162
      %v2164 = vtanh.pop %v2163
      %v2165 = vmul.f32 %v2160, %v2164
      %s2166 = scalar_lea.vmem [#allocation11], %s127
      %2167 = vst [vmem:[%s2166] sm:$0x3] %v2165
      %2169 = vset.pattern.permute.xlu0 0
      %2170 = vperm.xlu0 %2169, %v129
      %v2171 = vpop.permute.xlu0 %2170
      %v2173 = vmul.f32 %v2171, %v1400
      %v2174 = vmul.f32 %v2171, %v1401
      %v2177 = vcombine.low %v2173, %v2174
      %v2179 = vunpack.c.l.s4 1983009808
      %v2180 = vunpack.c.0.s8 %v2179
      %v2181 = vlaneseq
      %v2182 = vshrl.u32 %v2181, 7
      %v2183 = vsub.s32 %v2180, %v2182
      %v2184 = vrot.slane %v2177, %v2183
      %s2186 = smul.addr %s127, 2
      %s2187 = scalar_lea.vmem [#allocation12], %s2186
      %2188 = vst [vmem:[%s2187] sm:$0xf] %v2184
      %v2189 = vmul.f32 %v2171, %v2165
      %v2190 = vsub.f32 1.0, %v129
      %2192 = vset.pattern.permute.xlu0 0
      %2193 = vperm.xlu0 %2192, %v2190
      %v2194 = vpop.permute.xlu0 %2193
      %v2196 = vmul.f32 %v2194, %v125
      %v2197 = vadd.f32 %v2189, %v2196
      %v2198 = vmul.f32 %v2171, %v2163
      %v2199 = vmul.f32 %v2194, %v126
      %v2200 = vadd.f32 %v2198, %v2199
    $region70: #{tpu_custom_call.1} parent=1 // loop_footer
      %s124 = sadd.s32 1, %s120
    $region71: #{tpu_custom_call.1} parent=1 // loop_footer_branch
      %119 = sbr.rel target = $region67
    $region72: #{tpu_custom_call.1} parent=1 // loop_exit
      _
    // Predicated region
    $region73: #{tpu_custom_call.1} parent=1 // pred_check
      _
    $region74: #{tpu_custom_call.1} parent=1 // pred_check_branch
      %2202 = sbr.rel (0) target = $region76
    $region75: #{tpu_custom_call.1} parent=1 // pred_region
      %s2204 = ssub.s32 256, 256
      %2205 = vsyncadd [#allocation4], %s2204
      %s2206 = sshll.u32 [#allocation11], 4
      %s2207 = int_to_ptr.vmem [resolvable:$true] %s2206
      %2212 = dma.vmem_to_hbm [thread:$0]  %s2207, 256, %s11, [#allocation4], 32, 32, 2
    $region76: #{tpu_custom_call.1} parent=1 // pred_fallthru
      _
    // Predicated region
    $region77: #{tpu_custom_call.1} parent=1 // pred_check
      _
    $region78: #{tpu_custom_call.1} parent=1 // pred_check_branch
      %2214 = sbr.rel (0) target = $region80
    $region79: #{tpu_custom_call.1} parent=1 // pred_region
      %s2216 = ssub.s32 512, 512
      %2217 = vsyncadd [#allocation13], %s2216
      %s2218 = sshll.u32 [#allocation12], 4
      %s2219 = int_to_ptr.vmem [resolvable:$true] %s2218
      %2224 = dma.vmem_to_hbm [thread:$0]  %s2219, 512, %s12, [#allocation13], 64, 64, 4
    $region80: #{tpu_custom_call.1} parent=1 // pred_fallthru
      _
    // Predicated region
    $region81: #{tpu_custom_call.1} parent=1 // pred_check
      _
    $region82: #{tpu_custom_call.1} parent=1 // pred_check_branch
      %2226 = sbr.rel (0) target = $region84
    $region83: #{tpu_custom_call.1} parent=1 // pred_region
      %2227 = dma.done [#allocation4], 256
    $region84: #{tpu_custom_call.1} parent=1 // pred_fallthru
      _
    // Predicated region
    $region85: #{tpu_custom_call.1} parent=1 // pred_check
      _
    $region86: #{tpu_custom_call.1} parent=1 // pred_check_branch
      %2229 = sbr.rel (0) target = $region88
    $region87: #{tpu_custom_call.1} parent=1 // pred_region
      %2230 = dma.done [#allocation13], 512
    $region88: #{tpu_custom_call.1} parent=1 // pred_fallthru
      _
    %2231 = vsyncpa [#allocation3], 1
    %2232 = vsyncpa [#allocation6], 1
    %2233 = vsyncpa [#allocation9], 1
    %2234 = vsyncpa [#allocation4], 1
    %2235 = vsyncpa [#allocation13], 1

</llo_original>
